<compile_context>
chip_gen: v7x
topology: tpu7x:2x2x1
jax: 0.10.0
libtpu: 0.0.40
codegen_flags: <defaults>
</compile_context>

<pallas_src>
import functools

import jax
import jax.numpy as jnp
from jax.experimental import pallas as pl
from jax.experimental.pallas import tpu as pltpu

LANE = 128


def _round_up(x, m):
    return ((x + m - 1) // m) * m


def _pad_axis(x, axis, target):
    pad = target - x.shape[axis]
    if pad <= 0:
        return x
    widths = [(0, 0)] * x.ndim
    widths[axis] = (0, pad)
    return jnp.pad(x, widths)


# ----------------------------------------------------------------------------
# Pallas kernel: G graphs per grid step (grid axis = batch-of-graph groups).
# ----------------------------------------------------------------------------
def edge_gnn_kernel(adj_ref, h0_ref, wl_ref, bl_ref, wc_ref, bc_ref, out_ref,
                    *, num_layer, n_real, inv_n, g_pack):
    G = g_pack
    NP = adj_ref.shape[1]
    HP = h0_ref.shape[2]

    adj = adj_ref[...]                                           # (G, NP, NP) bf16
    h = h0_ref[...].reshape(G * NP, HP).astype(jnp.float32)      # (G*NP, HP) f32

    # EdgeGraphConv layers: h = relu((A @ h) @ W_l + b_l)   (static unroll)
    for i in range(num_layer):
        hb = h.astype(jnp.bfloat16).reshape(G, NP, HP)
        # per-graph aggregation: G independent MXU matmuls (bf16, f32 acc)
        agg = jnp.einsum('gij,gjh->gih', adj, hb,
                         preferred_element_type=jnp.float32)     # (G, NP, HP) f32
        # one shared-weight matmul over all G graphs: M = G*NP rows
        h = jnp.dot(agg.reshape(G * NP, HP).astype(jnp.bfloat16), wl_ref[i],
                    preferred_element_type=jnp.float32) + bl_ref[i]
        h = jnp.maximum(h, 0.0)                                  # ReLU (f32 VPU)

    # mean over *real* nodes per graph: cross-sublane sum on the XLU (idle
    # here) + VPU scale -- no f32-operand MXU push.
    h3 = h.reshape(G, NP, HP)
    if n_real < NP:
        h3 = h3[:, :n_real, :]        # padded nodes carry relu(bias) != 0: mask them
    hm = jnp.sum(h3, axis=1) * inv_n                             # (G, HP) f32

    # batched classify_fc: bf16 operands, lane-dense (G, 128) output block
    # (only column 0 is real; sliced host-side).
    p = jnp.dot(hm.astype(jnp.bfloat16), wc_ref[...],
                preferred_element_type=jnp.float32) + bc_ref[...]  # (G, LANE) f32
    out_ref[0] = p


# ----------------------------------------------------------------------------
# Wrapper: hoist feat_fc to XLA, pad to lane-dense bf16 operands, launch.
# ----------------------------------------------------------------------------
def edge_gnn_forward(adj, feat, params, num_layer, graphs_per_step=None):
    wf, bf, wl, bl, wc, bc = params
    B, N, F = feat.shape
    H = wf.shape[1]
    assert adj.shape == (B, N, N)

    NP = _round_up(N, 16)                       # bf16 packs 16 rows per vreg
    HP = _round_up(max(H, LANE), LANE)
    bf16 = jnp.bfloat16

    if graphs_per_step is None:
        graphs_per_step = min(B, 4)
    G = graphs_per_step
    num_steps = pl.cdiv(B, G)
    B_pad = num_steps * G
    # Note for v7x megacore: keep num_steps >= 2 (even B/G) so both TCs get work.

    # feat_fc hoisted into one batched XLA GEMM (F is tiny; avoids the
    # 8x-zero-padded contraction and the inflated feat DMA inside the kernel).
    h0 = jnp.einsum('bnf,fh->bnh', feat, wf,
                    preferred_element_type=jnp.float32) + bf     # (B, N, H) f32

    # Zero-pad to TPU-friendly shapes; MXU operands stored bf16, biases f32.
    h0_p = _pad_axis(_pad_axis(_pad_axis(h0, 2, HP), 1, NP), 0, B_pad).astype(bf16)
    adj_p = _pad_axis(_pad_axis(_pad_axis(adj, 2, NP), 1, NP), 0, B_pad).astype(bf16)
    wl_p = _pad_axis(_pad_axis(wl, 1, HP), 2, HP).astype(bf16)
    bl_p = _pad_axis(bl, 2, HP).astype(jnp.float32)
    wc_p = _pad_axis(_pad_axis(wc, 0, HP), 1, LANE).astype(bf16)   # pad to LANE only
    bc_p = _pad_axis(bc, 1, LANE).astype(jnp.float32)

    flops_per_step = (G * num_layer * 2 * NP * NP * HP          # adj @ h
                      + num_layer * 2 * (G * NP) * HP * HP      # agg @ W_l
                      + 2 * G * HP * LANE)                      # classify
    bytes_accessed = int(adj_p.size * 2 + h0_p.size * 2 + wl_p.size * 2
                         + wc_p.size * 2 + (bl_p.size + bc_p.size) * 4
                         + B_pad * LANE * 4)

    grid_spec = pltpu.PrefetchScalarGridSpec(
        num_scalar_prefetch=0,
        grid=(num_steps,),
        in_specs=[
            pl.BlockSpec((G, NP, NP), lambda b: (b, 0, 0)),           # adj group
            pl.BlockSpec((G, NP, HP), lambda b: (b, 0, 0)),           # h0 group
            pl.BlockSpec((num_layer, HP, HP), lambda b: (0, 0, 0)),   # wl (resident)
            pl.BlockSpec((num_layer, 1, HP), lambda b: (0, 0, 0)),    # bl
            pl.BlockSpec((HP, LANE), lambda b: (0, 0)),               # wc (col 0 real)
            pl.BlockSpec((1, LANE), lambda b: (0, 0)),                # bc (col 0 real)
        ],
        out_specs=pl.BlockSpec((1, G, LANE), lambda b: (b, 0, 0)),
    )

    out = pl.pallas_call(
        functools.partial(edge_gnn_kernel, num_layer=num_layer,
                          n_real=N, inv_n=1.0 / N, g_pack=G),
        out_shape=jax.ShapeDtypeStruct((num_steps, G, LANE), jnp.float32),
        grid_spec=grid_spec,
        compiler_params=pltpu.CompilerParams(
            dimension_semantics=("parallel",),
            vmem_limit_bytes=32 * 1024 * 1024,
        ),
        cost_estimate=pl.CostEstimate(
            flops=num_steps * flops_per_step,
            transcendentals=0,
            bytes_accessed=bytes_accessed,
        ),
    )(adj_p, h0_p, wl_p, bl_p, wc_p, bc_p)

    # Only lane 0 of each padded 128-wide row is real; drop phantom graphs.
    return out.reshape(B_pad, LANE)[:B, 0:1]     # (B, 1) per-graph classify logit


# ----------------------------------------------------------------------------
# Deterministic parameter init (synthetic; shapes follow the nn.Module)
# ----------------------------------------------------------------------------
def init_params(key, num_layer, num_feat, num_hidden):
    ks = jax.random.split(key, 6)
    scale = 0.1
    wf = scale * jax.random.normal(ks[0], (num_feat, num_hidden), jnp.float32)
    bf = scale * jax.random.normal(ks[1], (1, num_hidden), jnp.float32)
    wl = scale * jax.random.normal(ks[2], (num_layer, num_hidden, num_hidden),
                                   jnp.float32)
    bl = scale * jax.random.normal(ks[3], (num_layer, 1, num_hidden), jnp.float32)
    wc = scale * jax.random.normal(ks[4], (num_hidden, 1), jnp.float32)
    bc = scale * jax.random.normal(ks[5], (1, 1), jnp.float32)
    return wf, bf, wl, bl, wc, bc


def reference_forward(adj, feat, params, num_layer):
    """Pure-JAX reference mirroring the kernel math (bf16 operands, f32 acc)."""
    wf, bf, wl, bl, wc, bc = params
    b16 = jnp.bfloat16

    def one(adj_g, feat_g):
        h0 = jnp.dot(feat_g, wf, preferred_element_type=jnp.float32) + bf
        h = h0.astype(b16).astype(jnp.float32)
        for i in range(num_layer):
            agg = jnp.dot(adj_g.astype(b16), h.astype(b16),
                          preferred_element_type=jnp.float32)
            h = jnp.maximum(jnp.dot(agg.astype(b16), wl[i].astype(b16),
                                    preferred_element_type=jnp.float32) + bl[i],
                            0.0)
        hm = jnp.mean(h, axis=0, keepdims=True)
        p = jnp.dot(hm.astype(b16), wc.astype(b16),
                    preferred_element_type=jnp.float32) + bc
        return p.reshape(1)

    return jnp.stack([one(adj[b], feat[b]) for b in range(adj.shape[0])], axis=0)


# ----------------------------------------------------------------------------
if __name__ == "__main__":
    BATCH = 8
    NUM_NODES = 64
    NUM_FEAT = 16
    NUM_HIDDEN = 32
    NUM_LAYER = 2
    GRAPHS_PER_STEP = 4       # grid=(2,): both v7x TCs busy; M=G*N=256 per W_l matmul

    key = jax.random.PRNGKey(0)
    k_adj, k_feat, k_param = jax.random.split(key, 3)

    # dense weighted adjacencies standing in for the DGL graphs `g`
    adj = jax.random.uniform(k_adj, (BATCH, NUM_NODES, NUM_NODES), jnp.float32)
    adj = adj * (adj > 0.7)                    # sparsify a bit, keep edge weights
    feat = jax.random.normal(k_feat, (BATCH, NUM_NODES, NUM_FEAT), jnp.float32)

    params = init_params(k_param, NUM_LAYER, NUM_FEAT, NUM_HIDDEN)

    p = edge_gnn_forward(adj, feat, params, NUM_LAYER,
                         graphs_per_step=GRAPHS_PER_STEP)
    p = jax.block_until_ready(p)

    p_ref = reference_forward(adj, feat, params, NUM_LAYER)
    assert p.shape == (BATCH, 1)
    assert jnp.allclose(p, p_ref, atol=2e-2, rtol=2e-2), (p, p_ref)

    print("KERNEL_OK")
</pallas_src>

<mosaic_0001>
module attributes {stable_mosaic.version = 11 : i64} {
  func.func @edge_gnn_kernel(%arg0: i32, %arg1: memref<4x64x64xbf16, #tpu.memory_space<vmem>>, %arg2: memref<4x64x128xbf16, #tpu.memory_space<vmem>>, %arg3: memref<2x128x128xbf16, #tpu.memory_space<vmem>>, %arg4: memref<2x1x128xf32, #tpu.memory_space<vmem>>, %arg5: memref<128x128xbf16, #tpu.memory_space<vmem>>, %arg6: memref<1x128xf32, #tpu.memory_space<vmem>>, %arg7: memref<1x4x128xf32, #tpu.memory_space<vmem>>) attributes {dimension_semantics = [#tpu.dimension_semantics<parallel>], iteration_bounds = array<i64: 2>, scalar_prefetch = 0 : i64, scratch_operands = 0 : i64, tpu.core_type = #tpu.core_type<tc>, window_params = [{transform_indices = @transform_0, window_bounds = array<i64: 4, 64, 64>}, {transform_indices = @transform_1, window_bounds = array<i64: 4, 64, 128>}, {pipeline_mode = #tpu.pipeline_mode<synchronous>, transform_indices = @transform_2, window_bounds = array<i64: 2, 128, 128>}, {pipeline_mode = #tpu.pipeline_mode<synchronous>, transform_indices = @transform_3, window_bounds = array<i64: 2, 1, 128>}, {pipeline_mode = #tpu.pipeline_mode<synchronous>, transform_indices = @transform_4, window_bounds = array<i64: 128, 128>}, {pipeline_mode = #tpu.pipeline_mode<synchronous>, transform_indices = @transform_5, window_bounds = array<i64: 1, 128>}, {transform_indices = @transform_6, window_bounds = array<i64: 1, 4, 128>}]} {
    %c0 = arith.constant 0 : index
    %c0_0 = arith.constant 0 : index
    %c0_1 = arith.constant 0 : index
    %0 = vector.load %arg1[%c0, %c0_0, %c0_1] : memref<4x64x64xbf16, #tpu.memory_space<vmem>>, vector<4x64x64xbf16>
    %c0_2 = arith.constant 0 : index
    %c0_3 = arith.constant 0 : index
    %c0_4 = arith.constant 0 : index
    %1 = vector.load %arg2[%c0_2, %c0_3, %c0_4] : memref<4x64x128xbf16, #tpu.memory_space<vmem>>, vector<4x64x128xbf16>
    %2 = vector.shape_cast %1 : vector<4x64x128xbf16> to vector<256x128xbf16>
    %3 = arith.extf %2 : vector<256x128xbf16> to vector<256x128xf32>
    %4 = arith.truncf %3 : vector<256x128xf32> to vector<256x128xbf16>
    %5 = vector.shape_cast %4 : vector<256x128xbf16> to vector<4x64x128xbf16>
    "tpu.trace_start"() <{level = 10 : i32, message = "gij,gjh->gih"}> : () -> ()
    %cst = arith.constant dense<0.000000e+00> : vector<4x64x128xf32>
    %6 = tpu.matmul %0, %5, %cst {dimension_numbers = #tpu.dot_dimension_numbers<[2], [1], [1], [2], [0, 0, 0, 1, 1, 2], [0], [0]>} : vector<4x64x64xbf16>, vector<4x64x128xbf16>, vector<4x64x128xf32> -> vector<4x64x128xf32>
    "tpu.trace_stop"() : () -> ()
    %7 = vector.shape_cast %6 : vector<4x64x128xf32> to vector<256x128xf32>
    %8 = arith.truncf %7 : vector<256x128xf32> to vector<256x128xbf16>
    %c0_5 = arith.constant 0 : index
    %c0_6 = arith.constant 0 : index
    %c0_7 = arith.constant 0 : index
    %9 = vector.load %arg3[%c0_5, %c0_6, %c0_7] : memref<2x128x128xbf16, #tpu.memory_space<vmem>>, vector<1x128x128xbf16>
    %10 = vector.shape_cast %9 : vector<1x128x128xbf16> to vector<128x128xbf16>
    %cst_8 = arith.constant dense<0.000000e+00> : vector<256x128xf32>
    %11 = tpu.matmul %8, %10, %cst_8 {dimension_numbers = #tpu.dot_dimension_numbers<[1], [0], [0], [1], [0, 0, 1, 1], [], []>} : vector<256x128xbf16>, vector<128x128xbf16>, vector<256x128xf32> -> vector<256x128xf32>
    %c0_9 = arith.constant 0 : index
    %c0_10 = arith.constant 0 : index
    %c0_11 = arith.constant 0 : index
    %12 = vector.load %arg4[%c0_9, %c0_10, %c0_11] : memref<2x1x128xf32, #tpu.memory_space<vmem>>, vector<1x1x128xf32>
    %13 = vector.shape_cast %12 : vector<1x1x128xf32> to vector<1x128xf32>
    %14 = vector.broadcast %13 : vector<1x128xf32> to vector<256x128xf32>
    %15 = arith.addf %11, %14 : vector<256x128xf32>
    %cst_12 = arith.constant 0.000000e+00 : f32
    %16 = vector.broadcast %cst_12 : f32 to vector<256x128xf32>
    %17 = arith.maximumf %15, %16 : vector<256x128xf32>
    %18 = arith.truncf %17 : vector<256x128xf32> to vector<256x128xbf16>
    %19 = vector.shape_cast %18 : vector<256x128xbf16> to vector<4x64x128xbf16>
    "tpu.trace_start"() <{level = 10 : i32, message = "gij,gjh->gih"}> : () -> ()
    %cst_13 = arith.constant dense<0.000000e+00> : vector<4x64x128xf32>
    %20 = tpu.matmul %0, %19, %cst_13 {dimension_numbers = #tpu.dot_dimension_numbers<[2], [1], [1], [2], [0, 0, 0, 1, 1, 2], [0], [0]>} : vector<4x64x64xbf16>, vector<4x64x128xbf16>, vector<4x64x128xf32> -> vector<4x64x128xf32>
    "tpu.trace_stop"() : () -> ()
    %21 = vector.shape_cast %20 : vector<4x64x128xf32> to vector<256x128xf32>
    %22 = arith.truncf %21 : vector<256x128xf32> to vector<256x128xbf16>
    %c1 = arith.constant 1 : index
    %c0_14 = arith.constant 0 : index
    %c0_15 = arith.constant 0 : index
    %23 = vector.load %arg3[%c1, %c0_14, %c0_15] : memref<2x128x128xbf16, #tpu.memory_space<vmem>>, vector<1x128x128xbf16>
    %24 = vector.shape_cast %23 : vector<1x128x128xbf16> to vector<128x128xbf16>
    %cst_16 = arith.constant dense<0.000000e+00> : vector<256x128xf32>
    %25 = tpu.matmul %22, %24, %cst_16 {dimension_numbers = #tpu.dot_dimension_numbers<[1], [0], [0], [1], [0, 0, 1, 1], [], []>} : vector<256x128xbf16>, vector<128x128xbf16>, vector<256x128xf32> -> vector<256x128xf32>
    %c1_17 = arith.constant 1 : index
    %c0_18 = arith.constant 0 : index
    %c0_19 = arith.constant 0 : index
    %26 = vector.load %arg4[%c1_17, %c0_18, %c0_19] : memref<2x1x128xf32, #tpu.memory_space<vmem>>, vector<1x1x128xf32>
    %27 = vector.shape_cast %26 : vector<1x1x128xf32> to vector<1x128xf32>
    %28 = vector.broadcast %27 : vector<1x128xf32> to vector<256x128xf32>
    %29 = arith.addf %25, %28 : vector<256x128xf32>
    %cst_20 = arith.constant 0.000000e+00 : f32
    %30 = vector.broadcast %cst_20 : f32 to vector<256x128xf32>
    %31 = arith.maximumf %29, %30 : vector<256x128xf32>
    %32 = vector.shape_cast %31 : vector<256x128xf32> to vector<4x64x128xf32>
    %cst_21 = arith.constant dense<0.000000e+00> : vector<4x128xf32>
    %33 = vector.multi_reduction <add>, %32, %cst_21 [1] : vector<4x64x128xf32> to vector<4x128xf32>
    %cst_22 = arith.constant 1.562500e-02 : f32
    %34 = vector.broadcast %cst_22 : f32 to vector<4x128xf32>
    %35 = arith.mulf %33, %34 : vector<4x128xf32>
    %36 = arith.truncf %35 : vector<4x128xf32> to vector<4x128xbf16>
    %c0_23 = arith.constant 0 : index
    %c0_24 = arith.constant 0 : index
    %37 = vector.load %arg5[%c0_23, %c0_24] : memref<128x128xbf16, #tpu.memory_space<vmem>>, vector<128x128xbf16>
    %cst_25 = arith.constant dense<0.000000e+00> : vector<4x128xf32>
    %38 = tpu.matmul %36, %37, %cst_25 {dimension_numbers = #tpu.dot_dimension_numbers<[1], [0], [0], [1], [0, 0, 1, 1], [], []>} : vector<4x128xbf16>, vector<128x128xbf16>, vector<4x128xf32> -> vector<4x128xf32>
    %c0_26 = arith.constant 0 : index
    %c0_27 = arith.constant 0 : index
    %39 = vector.load %arg6[%c0_26, %c0_27] : memref<1x128xf32, #tpu.memory_space<vmem>>, vector<1x128xf32>
    %40 = vector.broadcast %39 : vector<1x128xf32> to vector<4x128xf32>
    %41 = arith.addf %38, %40 : vector<4x128xf32>
    %c0_28 = arith.constant 0 : index
    %c0_29 = arith.constant 0 : index
    %c0_30 = arith.constant 0 : index
    %42 = vector.load %arg7[%c0_28, %c0_29, %c0_30] : memref<1x4x128xf32, #tpu.memory_space<vmem>>, vector<1x4x128xf32>
    %43 = vector.shape_cast %42 : vector<1x4x128xf32> to vector<4x128xf32>
    %44 = vector.shape_cast %41 : vector<4x128xf32> to vector<1x4x128xf32>
    tpu.vector_store %arg7[%c0_28, %c0_29, %c0_30], %44 {strides = array<i32>} : memref<1x4x128xf32, #tpu.memory_space<vmem>>, vector<1x4x128xf32>,
    return
  }
  func.func @transform_0(%arg0: i32) -> (i32, i32, i32) {
    %c0_i32 = arith.constant 0 : i32
    %c0_i32_0 = arith.constant 0 : i32
    %c0_i32_1 = arith.constant 0 : i32
    return %arg0, %c0_i32, %c0_i32_0 : i32, i32, i32
  }
  func.func @transform_1(%arg0: i32) -> (i32, i32, i32) {
    %c0_i32 = arith.constant 0 : i32
    %c0_i32_0 = arith.constant 0 : i32
    %c0_i32_1 = arith.constant 0 : i32
    return %arg0, %c0_i32, %c0_i32_0 : i32, i32, i32
  }
  func.func @transform_2(%arg0: i32) -> (i32, i32, i32) {
    %c0_i32 = arith.constant 0 : i32
    %c0_i32_0 = arith.constant 0 : i32
    %c0_i32_1 = arith.constant 0 : i32
    %c0_i32_2 = arith.constant 0 : i32
    return %c0_i32, %c0_i32_0, %c0_i32_1 : i32, i32, i32
  }
  func.func @transform_3(%arg0: i32) -> (i32, i32, i32) {
    %c0_i32 = arith.constant 0 : i32
    %c0_i32_0 = arith.constant 0 : i32
    %c0_i32_1 = arith.constant 0 : i32
    %c0_i32_2 = arith.constant 0 : i32
    return %c0_i32, %c0_i32_0, %c0_i32_1 : i32, i32, i32
  }
  func.func @transform_4(%arg0: i32) -> (i32, i32) {
    %c0_i32 = arith.constant 0 : i32
    %c0_i32_0 = arith.constant 0 : i32
    %c0_i32_1 = arith.constant 0 : i32
    return %c0_i32, %c0_i32_0 : i32, i32
  }
  func.func @transform_5(%arg0: i32) -> (i32, i32) {
    %c0_i32 = arith.constant 0 : i32
    %c0_i32_0 = arith.constant 0 : i32
    %c0_i32_1 = arith.constant 0 : i32
    return %c0_i32, %c0_i32_0 : i32, i32
  }
  func.func @transform_6(%arg0: i32) -> (i32, i32, i32) {
    %c0_i32 = arith.constant 0 : i32
    %c0_i32_0 = arith.constant 0 : i32
    %c0_i32_1 = arith.constant 0 : i32
    return %arg0, %c0_i32, %c0_i32_0 : i32, i32, i32
  }
}

</mosaic_0001>

<llo_original>
// kernel: tpu_custom_call.1
$region0: #{tpu_custom_call.1}
  #allocation0 [shape = 'u32[]', space=smem, size = 0x4, offset = 0x4, fixed_abs, tag = 'smem constant byte address 0x4 - core index']
  #allocation1 [shape = 'u32[144,128]{1,0:T(1,128)}', space=vmem, size = 0x12000, scoped, tag = 'internal scratch']
  %s0 = inlined_call_operand.hbm [shape: bf16[8,64,64], index: 0, kind: input, shape index: {}]
  %s1 = inlined_call_operand.hbm [shape: bf16[8,64,128], index: 1, kind: input, shape index: {}]
  %s2 = inlined_call_operand.hbm [shape: bf16[2,128,128], index: 2, kind: input, shape index: {}]
  %s3 = inlined_call_operand.vmem [shape: f32[2,1,128], index: 3, kind: input, shape index: {}]
  %s4 = inlined_call_operand.hbm [shape: bf16[128,128], index: 4, kind: input, shape index: {}]
  %s5 = inlined_call_operand.vmem [shape: f32[1,128], index: 5, kind: input, shape index: {}]
  %s6 = inlined_call_operand.hbm [shape: f32[2,4,128], index: 6, kind: output, shape index: {}]
  %s7 = sld [smem:[#allocation0]]
  $region73: #{tpu_custom_call.1} parent=0
    _
  %s9 = ssub.s32 1, %s7
  %s10 = scalar_select 0, %s9, %s7
  $region1: #{tpu_custom_call.1} parent=0
    #allocation2 [shape = 'u8[131072]{0}', space=vmem, size = 0x20000, scoped, tag = 'input window, operand 0']
    #allocation3 [shape = 's32[2]{0}', space=sflag, size = 0x8, scoped, tag = 'scoped memory for tpu_custom_call.1']
    #allocation4 [shape = 's32[2]{0}', space=sflag, size = 0x8, scoped, tag = 'scoped memory for tpu_custom_call.1']
    #allocation5 [shape = 'u8[131072]{0}', space=vmem, size = 0x20000, scoped, tag = 'input window, operand 1']
    #allocation6 [shape = 's32[2]{0}', space=sflag, size = 0x8, scoped, tag = 'scoped memory for tpu_custom_call.1']
    #allocation7 [shape = 'u8[65536]{0}', space=vmem, size = 0x10000, scoped, tag = 'input window, operand 2, single buffered']
    #allocation8 [shape = 'u8[32768]{0}', space=vmem, size = 0x8000, scoped, tag = 'input window, operand 4, single buffered']
    #allocation9 [shape = 's32[1]{0}', space=sflag, size = 0x4, scoped, tag = 'scoped memory for tpu_custom_call.1']
    #allocation10 [shape = 'u8[4096]{0}', space=vmem, size = 0x1000, scoped, tag = 'output window, operand 0']
    %11 = vsyncpa [#allocation3], 0
    %s12 = scalar_lea.sflag [#allocation3], 1
    %13 = vsyncpa %s12, 0
    %14 = vsyncpa [#allocation6], 0
    %s15 = scalar_lea.sflag [#allocation6], 1
    %16 = vsyncpa %s15, 0
    %17 = vsyncpa [#allocation9], 0
    %18 = vsyncpa [#allocation4], 0
    %s19 = scalar_lea.sflag [#allocation4], 1
    %20 = vsyncpa %s19, 0
    loop: start=0, step=1, limit=4
    $region2: #{tpu_custom_call.1} parent=1 // loop_pre_header
      _
    $region3: #{tpu_custom_call.1} parent=1 // loop_header
      %s22 = sphi 0, %s26
      %p23 = scmp.ge.s32.totalorder %s22, 4
      %s32 = sphi 0, %s34
      %s35 = sphi 0, %s32
      %s36 = sphi 0, %s35
      %s52 = sphi 0, %s36
      %s58 = sphi 0, %s60
      %s61 = sphi 0, %s58
      %s62 = sphi 0, %s61
      %s78 = sphi 0, %s62
      %s82 = sphi 0, %s82
      %s84 = sphi 0, %s82
      %s85 = sphi 0, %s84
      %s99 = sphi 0, %s85
      %s103 = sphi 0, %s103
      %s105 = sphi 0, %s103
      %s106 = sphi 0, %s105
      %s120 = sphi 0, %s106
      %s124 = sphi 0, %s124
      %s126 = sphi 0, %s124
      %s127 = sphi 0, %s126
      %s141 = sphi 0, %s127
      %s145 = sphi 0, %s145
      %s147 = sphi 0, %s145
      %s148 = sphi 0, %s147
      %s162 = sphi 0, %s148
      %s168 = sphi 0, %s170
      %s171 = sphi 0, %s168
      %s172 = sphi 0, %s171
      %s188 = sphi 0, %s172
    $region4: #{tpu_custom_call.1} parent=1 // loop_header_branch
      %25 = sbr.rel (%p23) target = $region8
    $region5: #{tpu_custom_call.1} parent=1 // loop_body
      %s27 = ssub.s32 %s22, 1
      %s28 = ssub.s32 %s22, 2
      %s29 = sadd.s32 %s22, 1
      %s30 = ssub.s32 %s22, %s29
      %p31 = scmp.eq.s32.totalorder %s30, 0
      %s33 = sadd.s32 %s32, 1
      %s34 = scalar_select %p31, %s32, %s33
      %p37 = pneg %p31
      %p38 = scmp.eq.s32.totalorder %s22, 1
      %p39 = por %p37, %p38
      %p40 = scmp.ne.s32.totalorder %s32, %s35
      %p41 = scmp.eq.s32.totalorder %s22, 0
      %p42 = por %p40, %p41
      %p43 = scmp.ne.s32.totalorder %s32, %s35
      %p44 = scmp.eq.s32.totalorder %s27, 1
      %p45 = por %p43, %p44
      %p46 = scmp.ne.s32.totalorder %s35, %s36
      %p47 = scmp.eq.s32.totalorder %s27, 0
      %p48 = por %p46, %p47
      %p49 = scmp.ne.s32.totalorder %s35, %s36
      %p50 = scmp.eq.s32.totalorder %s28, 1
      %p51 = por %p49, %p50
      %p53 = scmp.ne.s32.totalorder %s36, %s52
      %p54 = scmp.eq.s32.totalorder %s28, 0
      %p55 = por %p53, %p54
      %s56 = ssub.s32 %s22, %s29
      %p57 = scmp.eq.s32.totalorder %s56, 0
      %s59 = sadd.s32 %s58, 1
      %s60 = scalar_select %p57, %s58, %s59
      %p63 = pneg %p57
      %p64 = scmp.eq.s32.totalorder %s22, 1
      %p65 = por %p63, %p64
      %p66 = scmp.ne.s32.totalorder %s58, %s61
      %p67 = scmp.eq.s32.totalorder %s22, 0
      %p68 = por %p66, %p67
      %p69 = scmp.ne.s32.totalorder %s58, %s61
      %p70 = scmp.eq.s32.totalorder %s27, 1
      %p71 = por %p69, %p70
      %p72 = scmp.ne.s32.totalorder %s61, %s62
      %p73 = scmp.eq.s32.totalorder %s27, 0
      %p74 = por %p72, %p73
      %p75 = scmp.ne.s32.totalorder %s61, %s62
      %p76 = scmp.eq.s32.totalorder %s28, 1
      %p77 = por %p75, %p76
      %p79 = scmp.ne.s32.totalorder %s62, %s78
      %p80 = scmp.eq.s32.totalorder %s28, 0
      %p81 = por %p79, %p80
      %s83 = sadd.s32 %s82, 1
      %p86 = scmp.eq.s32.totalorder %s22, 1
      %p87 = scmp.ne.s32.totalorder %s82, %s84
      %p88 = scmp.eq.s32.totalorder %s22, 0
      %p89 = por %p87, %p88
      %p90 = scmp.ne.s32.totalorder %s82, %s84
      %p91 = scmp.eq.s32.totalorder %s27, 1
      %p92 = por %p90, %p91
      %p93 = scmp.ne.s32.totalorder %s84, %s85
      %p94 = scmp.eq.s32.totalorder %s27, 0
      %p95 = por %p93, %p94
      %p96 = scmp.ne.s32.totalorder %s84, %s85
      %p97 = scmp.eq.s32.totalorder %s28, 1
      %p98 = por %p96, %p97
      %p100 = scmp.ne.s32.totalorder %s85, %s99
      %p101 = scmp.eq.s32.totalorder %s28, 0
      %p102 = por %p100, %p101
      %s104 = sadd.s32 %s103, 1
      %p107 = scmp.eq.s32.totalorder %s22, 1
      %p108 = scmp.ne.s32.totalorder %s103, %s105
      %p109 = scmp.eq.s32.totalorder %s22, 0
      %p110 = por %p108, %p109
      %p111 = scmp.ne.s32.totalorder %s103, %s105
      %p112 = scmp.eq.s32.totalorder %s27, 1
      %p113 = por %p111, %p112
      %p114 = scmp.ne.s32.totalorder %s105, %s106
      %p115 = scmp.eq.s32.totalorder %s27, 0
      %p116 = por %p114, %p115
      %p117 = scmp.ne.s32.totalorder %s105, %s106
      %p118 = scmp.eq.s32.totalorder %s28, 1
      %p119 = por %p117, %p118
      %p121 = scmp.ne.s32.totalorder %s106, %s120
      %p122 = scmp.eq.s32.totalorder %s28, 0
      %p123 = por %p121, %p122
      %s125 = sadd.s32 %s124, 1
      %p128 = scmp.eq.s32.totalorder %s22, 1
      %p129 = scmp.ne.s32.totalorder %s124, %s126
      %p130 = scmp.eq.s32.totalorder %s22, 0
      %p131 = por %p129, %p130
      %p132 = scmp.ne.s32.totalorder %s124, %s126
      %p133 = scmp.eq.s32.totalorder %s27, 1
      %p134 = por %p132, %p133
      %p135 = scmp.ne.s32.totalorder %s126, %s127
      %p136 = scmp.eq.s32.totalorder %s27, 0
      %p137 = por %p135, %p136
      %p138 = scmp.ne.s32.totalorder %s126, %s127
      %p139 = scmp.eq.s32.totalorder %s28, 1
      %p140 = por %p138, %p139
      %p142 = scmp.ne.s32.totalorder %s127, %s141
      %p143 = scmp.eq.s32.totalorder %s28, 0
      %p144 = por %p142, %p143
      %s146 = sadd.s32 %s145, 1
      %p149 = scmp.eq.s32.totalorder %s22, 1
      %p150 = scmp.ne.s32.totalorder %s145, %s147
      %p151 = scmp.eq.s32.totalorder %s22, 0
      %p152 = por %p150, %p151
      %p153 = scmp.ne.s32.totalorder %s145, %s147
      %p154 = scmp.eq.s32.totalorder %s27, 1
      %p155 = por %p153, %p154
      %p156 = scmp.ne.s32.totalorder %s147, %s148
      %p157 = scmp.eq.s32.totalorder %s27, 0
      %p158 = por %p156, %p157
      %p159 = scmp.ne.s32.totalorder %s147, %s148
      %p160 = scmp.eq.s32.totalorder %s28, 1
      %p161 = por %p159, %p160
      %p163 = scmp.ne.s32.totalorder %s148, %s162
      %p164 = scmp.eq.s32.totalorder %s28, 0
      %p165 = por %p163, %p164
      %s166 = ssub.s32 %s22, %s29
      %p167 = scmp.eq.s32.totalorder %s166, 0
      %s169 = sadd.s32 %s168, 1
      %s170 = scalar_select %p167, %s168, %s169
      %p173 = pneg %p167
      %p174 = scmp.eq.s32.totalorder %s22, 1
      %p175 = por %p173, %p174
      %p176 = scmp.ne.s32.totalorder %s168, %s171
      %p177 = scmp.eq.s32.totalorder %s22, 0
      %p178 = por %p176, %p177
      %p179 = scmp.ne.s32.totalorder %s168, %s171
      %p180 = scmp.eq.s32.totalorder %s27, 1
      %p181 = por %p179, %p180
      %p182 = scmp.ne.s32.totalorder %s171, %s172
      %p183 = scmp.eq.s32.totalorder %s27, 0
      %p184 = por %p182, %p183
      %p185 = scmp.ne.s32.totalorder %s171, %s172
      %p186 = scmp.eq.s32.totalorder %s28, 1
      %p187 = por %p185, %p186
      %p189 = scmp.ne.s32.totalorder %s172, %s188
      %p190 = scmp.eq.s32.totalorder %s28, 0
      %p191 = por %p189, %p190
      %p192 = scmp.le.s32.totalorder 1, %s22
      %p193 = scmp.lt.s32.totalorder %s22, 3
      %p194 = pnand %p192, %p193
      %p195 = pneg %p194
      // Predicated region
      $region9: #{tpu_custom_call.1} parent=5 // pred_check
        _
      $region10: #{tpu_custom_call.1} parent=5 // pred_check_branch
        %197 = sbr.rel (%p194) target = $region12
      $region11: #{tpu_custom_call.1} parent=5 // pred_region
        %s198 = ssub.s32 %s22, 1
        // Predicated region
        $region13: #{tpu_custom_call.1} parent=11 // pred_check
          %p199 = pneg %p95
        $region14: #{tpu_custom_call.1} parent=11 // pred_check_branch
          %201 = sbr.rel (%p199) target = $region16
        $region15: #{tpu_custom_call.1} parent=11 // pred_region
          %s203 = ssub.s32 2048, 2048
          %204 = vsyncadd [#allocation6], %s203
          %s205 = sshll.u32 [#allocation7], 4
          %s206 = int_to_ptr.vmem [resolvable:$true] %s205
          %211 = dma.hbm_to_vmem [thread:$0]  %s2, 2048, %s206, [#allocation6], 64, 64, 4
        $region16: #{tpu_custom_call.1} parent=11 // pred_fallthru
          _
        // Predicated region
        $region17: #{tpu_custom_call.1} parent=11 // pred_check
          %p212 = pneg %p116
        $region18: #{tpu_custom_call.1} parent=11 // pred_check_branch
          %214 = sbr.rel (%p212) target = $region20
        $region19: #{tpu_custom_call.1} parent=11 // pred_region
          _
        $region20: #{tpu_custom_call.1} parent=11 // pred_fallthru
          _
        // Predicated region
        $region21: #{tpu_custom_call.1} parent=11 // pred_check
          %p215 = pneg %p137
        $region22: #{tpu_custom_call.1} parent=11 // pred_check_branch
          %217 = sbr.rel (%p215) target = $region24
        $region23: #{tpu_custom_call.1} parent=11 // pred_region
          %s219 = ssub.s32 1024, 1024
          %220 = vsyncadd [#allocation9], %s219
          %s221 = sshll.u32 [#allocation8], 4
          %s222 = int_to_ptr.vmem [resolvable:$true] %s221
          %227 = dma.hbm_to_vmem [thread:$0]  %s4, 1024, %s222, [#allocation9], 64, 64, 4
        $region24: #{tpu_custom_call.1} parent=11 // pred_fallthru
          _
        // Predicated region
        $region25: #{tpu_custom_call.1} parent=11 // pred_check
          %p228 = pneg %p158
        $region26: #{tpu_custom_call.1} parent=11 // pred_check_branch
          %230 = sbr.rel (%p228) target = $region28
        $region27: #{tpu_custom_call.1} parent=11 // pred_region
          _
        $region28: #{tpu_custom_call.1} parent=11 // pred_fallthru
          _
      $region12: #{tpu_custom_call.1} parent=5 // pred_fallthru
        _
      %p231 = scmp.lt.s32.totalorder %s22, 2
      // Predicated region
      $region29: #{tpu_custom_call.1} parent=5 // pred_check
        %p232 = pneg %p231
      $region30: #{tpu_custom_call.1} parent=5 // pred_check_branch
        %234 = sbr.rel (%p232) target = $region32
      $region31: #{tpu_custom_call.1} parent=5 // pred_region
        // Predicated region
        $region33: #{tpu_custom_call.1} parent=31 // pred_check
          %p235 = pneg %p42
        $region34: #{tpu_custom_call.1} parent=31 // pred_check_branch
          %237 = sbr.rel (%p235) target = $region36
        $region35: #{tpu_custom_call.1} parent=31 // pred_region
          %s238 = sand.u32 %s32, 1
          %s239 = scalar_lea.sflag [#allocation3], %s238
          %s240 = sand.u32 %s32, 1
          %s241 = smul.addr %s240, 128
          %s242 = scalar_lea.vmem [#allocation2], %s241
          %s243 = smul.u32 4, %s22
          %s245 = ssub.s32 2048, 2048
          %246 = vsyncadd %s239, %s245
          %s247 = smul.addr %s243, 8
          %s248 = smul.addr %s247, 64
          %s249 = scalar_lea.hbm %s0, %s248
          %s250 = sshll.u32 %s242, 4
          %s251 = int_to_ptr.vmem [resolvable:$true] %s250
          %256 = dma.hbm_to_vmem [thread:$0]  %s249, 2048, %s251, %s239, 64, 64, 4
        $region36: #{tpu_custom_call.1} parent=31 // pred_fallthru
          _
        // Predicated region
        $region37: #{tpu_custom_call.1} parent=31 // pred_check
          %p257 = pneg %p68
        $region38: #{tpu_custom_call.1} parent=31 // pred_check_branch
          %259 = sbr.rel (%p257) target = $region40
        $region39: #{tpu_custom_call.1} parent=31 // pred_region
          %s260 = sand.u32 %s22, 1
          %s261 = scalar_lea.sflag [#allocation6], %s260
          %s262 = sand.u32 %s58, 1
          %s263 = smul.addr %s262, 128
          %s264 = scalar_lea.vmem [#allocation5], %s263
          %s265 = smul.u32 4, %s22
          %s267 = ssub.s32 2048, 2048
          %268 = vsyncadd %s261, %s267
          %s269 = smul.addr %s265, 8
          %s270 = smul.addr %s269, 64
          %s271 = scalar_lea.hbm %s1, %s270
          %s272 = sshll.u32 %s264, 4
          %s273 = int_to_ptr.vmem [resolvable:$true] %s272
          %278 = dma.hbm_to_vmem [thread:$0]  %s271, 2048, %s273, %s261, 64, 64, 4
        $region40: #{tpu_custom_call.1} parent=31 // pred_fallthru
          _
      $region32: #{tpu_custom_call.1} parent=5 // pred_fallthru
        _
      %p279 = scmp.le.s32.totalorder 1, %s22
      %p280 = scmp.lt.s32.totalorder %s22, 3
      %p281 = pnand %p279, %p280
      %p282 = pneg %p281
      // Predicated region
      $region41: #{tpu_custom_call.1} parent=5 // pred_check
        _
      $region42: #{tpu_custom_call.1} parent=5 // pred_check_branch
        %284 = sbr.rel (%p281) target = $region44
      $region43: #{tpu_custom_call.1} parent=5 // pred_region
        %s285 = ssub.s32 %s22, 1
        %s286 = sand.u32 %s35, 1
        %s287 = scalar_lea.sflag [#allocation3], %s286
        %s288 = sand.u32 %s35, 1
        %s289 = smul.addr %s288, 128
        %s290 = scalar_lea.vmem [#allocation2], %s289
        // Predicated region
        $region45: #{tpu_custom_call.1} parent=43 // pred_check
          %p291 = pneg %p48
        $region46: #{tpu_custom_call.1} parent=43 // pred_check_branch
          %293 = sbr.rel (%p291) target = $region48
        $region47: #{tpu_custom_call.1} parent=43 // pred_region
          %294 = dma.done %s287, 2048
        $region48: #{tpu_custom_call.1} parent=43 // pred_fallthru
          _
        %s295 = sand.u32 %s27, 1
        %s296 = scalar_lea.sflag [#allocation6], %s295
        %s297 = sand.u32 %s61, 1
        %s298 = smul.addr %s297, 128
        %s299 = scalar_lea.vmem [#allocation5], %s298
        // Predicated region
        $region49: #{tpu_custom_call.1} parent=43 // pred_check
          %p300 = pneg %p74
        $region50: #{tpu_custom_call.1} parent=43 // pred_check_branch
          %302 = sbr.rel (%p300) target = $region52
        $region51: #{tpu_custom_call.1} parent=43 // pred_region
          %303 = dma.done %s296, 2048
        $region52: #{tpu_custom_call.1} parent=43 // pred_fallthru
          _
        // Predicated region
        $region53: #{tpu_custom_call.1} parent=43 // pred_check
          %p304 = pneg %p95
        $region54: #{tpu_custom_call.1} parent=43 // pred_check_branch
          %306 = sbr.rel (%p304) target = $region56
        $region55: #{tpu_custom_call.1} parent=43 // pred_region
          %307 = dma.done [#allocation6], 2048
        $region56: #{tpu_custom_call.1} parent=43 // pred_fallthru
          _
        // Predicated region
        $region57: #{tpu_custom_call.1} parent=43 // pred_check
          %p308 = pneg %p137
        $region58: #{tpu_custom_call.1} parent=43 // pred_check_branch
          %310 = sbr.rel (%p308) target = $region60
        $region59: #{tpu_custom_call.1} parent=43 // pred_region
          %311 = dma.done [#allocation9], 1024
        $region60: #{tpu_custom_call.1} parent=43 // pred_fallthru
          _
        %s312 = sand.u32 %s35, 1
        %s313 = scalar_lea.sflag [#allocation3], %s312
        %s314 = sand.u32 %s35, 1
        %s315 = smul.addr %s314, 128
        %s316 = scalar_lea.vmem [#allocation2], %s315
        %p317 = pneg %p48
        %p318 = pneg %p45
        %s319 = sand.u32 %s27, 1
        %s320 = scalar_lea.sflag [#allocation6], %s319
        %s321 = sand.u32 %s61, 1
        %s322 = smul.addr %s321, 128
        %s323 = scalar_lea.vmem [#allocation5], %s322
        %p324 = pneg %p74
        %p325 = pneg %p71
        %p326 = pneg %p95
        %p327 = pneg %p92
        %p328 = pneg %p116
        %p329 = pneg %p113
        %p330 = pneg %p137
        %p331 = pneg %p134
        %p332 = pneg %p158
        %p333 = pneg %p155
        %p334 = pneg %p184
        %p335 = pneg %p181
        %s336 = sand.u32 %s171, 1
        %s337 = scalar_lea.sflag [#allocation4], %s336
        %s338 = sand.u32 %s171, 1
        %s339 = smul.addr %s338, 4
        %s340 = scalar_lea.vmem [#allocation10], %s339
        %s341 = smul.u32 4, %s27
        %s342 = smul.u32 4, %s27
        %v344 = vld [vmem:[%s290] sm:$0xf]
        %v345 = vld [vmem:[%s290 + $0x4] sm:$0xf]
        %v346 = vld [vmem:[%s290 + $0x8] sm:$0xf]
        %v347 = vld [vmem:[%s290 + $0xc] sm:$0xf]
        %v348 = vld [vmem:[%s290 + $0x10] sm:$0xf]
        %v349 = vld [vmem:[%s290 + $0x14] sm:$0xf]
        %v350 = vld [vmem:[%s290 + $0x18] sm:$0xf]
        %v351 = vld [vmem:[%s290 + $0x1c] sm:$0xf]
        %v352 = vld [vmem:[%s290 + $0x20] sm:$0xf]
        %v353 = vld [vmem:[%s290 + $0x24] sm:$0xf]
        %v354 = vld [vmem:[%s290 + $0x28] sm:$0xf]
        %v355 = vld [vmem:[%s290 + $0x2c] sm:$0xf]
        %v356 = vld [vmem:[%s290 + $0x30] sm:$0xf]
        %v357 = vld [vmem:[%s290 + $0x34] sm:$0xf]
        %v358 = vld [vmem:[%s290 + $0x38] sm:$0xf]
        %v359 = vld [vmem:[%s290 + $0x3c] sm:$0xf]
        %v360 = vld [vmem:[%s290 + $0x40] sm:$0xf]
        %v361 = vld [vmem:[%s290 + $0x44] sm:$0xf]
        %v362 = vld [vmem:[%s290 + $0x48] sm:$0xf]
        %v363 = vld [vmem:[%s290 + $0x4c] sm:$0xf]
        %v364 = vld [vmem:[%s290 + $0x50] sm:$0xf]
        %v365 = vld [vmem:[%s290 + $0x54] sm:$0xf]
        %v366 = vld [vmem:[%s290 + $0x58] sm:$0xf]
        %v367 = vld [vmem:[%s290 + $0x5c] sm:$0xf]
        %v368 = vld [vmem:[%s290 + $0x60] sm:$0xf]
        %v369 = vld [vmem:[%s290 + $0x64] sm:$0xf]
        %v370 = vld [vmem:[%s290 + $0x68] sm:$0xf]
        %v371 = vld [vmem:[%s290 + $0x6c] sm:$0xf]
        %v372 = vld [vmem:[%s290 + $0x70] sm:$0xf]
        %v373 = vld [vmem:[%s290 + $0x74] sm:$0xf]
        %v374 = vld [vmem:[%s290 + $0x78] sm:$0xf]
        %v375 = vld [vmem:[%s290 + $0x7c] sm:$0xf]
        %v376 = vld [vmem:[%s299] sm:$0xf]
        %v377 = vld [vmem:[%s299 + $0x4] sm:$0xf]
        %v378 = vld [vmem:[%s299 + $0x8] sm:$0xf]
        %v379 = vld [vmem:[%s299 + $0xc] sm:$0xf]
        %v380 = vld [vmem:[%s299 + $0x10] sm:$0xf]
        %v381 = vld [vmem:[%s299 + $0x14] sm:$0xf]
        %v382 = vld [vmem:[%s299 + $0x18] sm:$0xf]
        %v383 = vld [vmem:[%s299 + $0x1c] sm:$0xf]
        %v384 = vld [vmem:[%s299 + $0x20] sm:$0xf]
        %v385 = vld [vmem:[%s299 + $0x24] sm:$0xf]
        %v386 = vld [vmem:[%s299 + $0x28] sm:$0xf]
        %v387 = vld [vmem:[%s299 + $0x2c] sm:$0xf]
        %v388 = vld [vmem:[%s299 + $0x30] sm:$0xf]
        %v389 = vld [vmem:[%s299 + $0x34] sm:$0xf]
        %v390 = vld [vmem:[%s299 + $0x38] sm:$0xf]
        %v391 = vld [vmem:[%s299 + $0x3c] sm:$0xf]
        %v392 = vld [vmem:[%s299 + $0x40] sm:$0xf]
        %v393 = vld [vmem:[%s299 + $0x44] sm:$0xf]
        %v394 = vld [vmem:[%s299 + $0x48] sm:$0xf]
        %v395 = vld [vmem:[%s299 + $0x4c] sm:$0xf]
        %v396 = vld [vmem:[%s299 + $0x50] sm:$0xf]
        %v397 = vld [vmem:[%s299 + $0x54] sm:$0xf]
        %v398 = vld [vmem:[%s299 + $0x58] sm:$0xf]
        %v399 = vld [vmem:[%s299 + $0x5c] sm:$0xf]
        %v400 = vld [vmem:[%s299 + $0x60] sm:$0xf]
        %v401 = vld [vmem:[%s299 + $0x64] sm:$0xf]
        %v402 = vld [vmem:[%s299 + $0x68] sm:$0xf]
        %v403 = vld [vmem:[%s299 + $0x6c] sm:$0xf]
        %v404 = vld [vmem:[%s299 + $0x70] sm:$0xf]
        %v405 = vld [vmem:[%s299 + $0x74] sm:$0xf]
        %v406 = vld [vmem:[%s299 + $0x78] sm:$0xf]
        %v407 = vld [vmem:[%s299 + $0x7c] sm:$0xf]
        %v416 = vunpack.c.l.b16 %v344
        %v417 = vunpack.c.l.b16 %v345
        %v418 = vunpack.c.l.b16 %v346
        %v419 = vunpack.c.l.b16 %v347
        %v420 = vunpack.c.l.b16 %v348
        %v421 = vunpack.c.l.b16 %v349
        %v422 = vunpack.c.l.b16 %v350
        %v423 = vunpack.c.l.b16 %v351
        %v424 = vpack.c.b16 %v417, %v416
        %v425 = vpack.c.b16 %v419, %v418
        %v426 = vpack.c.b16 %v421, %v420
        %v427 = vpack.c.b16 %v423, %v422
        %v436 = vunpack.c.l.b16 %v376
        %v437 = vunpack.c.l.b16 %v377
        %v438 = vunpack.c.l.b16 %v378
        %v439 = vunpack.c.l.b16 %v379
        %v440 = vunpack.c.l.b16 %v380
        %v441 = vunpack.c.l.b16 %v381
        %v442 = vunpack.c.l.b16 %v382
        %v443 = vunpack.c.l.b16 %v383
        %v444 = vpack.c.b16 %v437, %v436
        %v445 = vpack.c.b16 %v439, %v438
        %v446 = vpack.c.b16 %v441, %v440
        %v447 = vpack.c.b16 %v443, %v442
        %vm452 = vcmask 523264
        %v454 = vsel %vm452, %v424, 0
        %v457 = vsel %vm452, %v425, 0
        %v460 = vsel %vm452, %v426, 0
        %v463 = vsel %vm452, %v427, 0
        %465 = vmatprep.subr.bf16.mxu0 0
        %466 = vmatpush1.bf16.msra.mxu0 %v444
        %467 = vmatprep.subr.bf16.mxu0 0
        %468 = vmatpush1.bf16.msra.mxu0 %v445
        %469 = vmatprep.subr.bf16.mxu0 0
        %470 = vmatpush1.bf16.msra.mxu0 %v446
        %471 = vmatprep.subr.bf16.mxu0 0
        %472 = vmatpush1.bf16.msra.mxu0 %v447
        %473 = vmatprep.subr.bf16.mxu0 0
        %474 = vmatpush1.bf16.msra.mxu0 0
        %475 = vmatprep.subr.bf16.mxu0 0
        %476 = vmatpush1.bf16.msra.mxu0 0
        %477 = vmatprep.subr.bf16.mxu0 0
        %478 = vmatpush1.bf16.msra.mxu0 0
        %479 = vmatprep.subr.bf16.mxu0 0
        %480 = vmatpush1.bf16.msra.mxu0 0
        %481 = vmatprep.subr.bf16.mxu0 0
        %482 = vmatpush1.bf16.msra.mxu0 0
        %483 = vmatprep.subr.bf16.mxu0 0
        %484 = vmatpush1.bf16.msra.mxu0 0
        %485 = vmatprep.subr.bf16.mxu0 0
        %486 = vmatpush1.bf16.msra.mxu0 0
        %487 = vmatprep.subr.bf16.mxu0 0
        %488 = vmatpush1.bf16.msra.mxu0 0
        %489 = vmatprep.subr.bf16.mxu0 0
        %490 = vmatpush1.bf16.msra.mxu0 0
        %491 = vmatprep.subr.bf16.mxu0 0
        %492 = vmatpush1.bf16.msra.mxu0 0
        %493 = vmatprep.subr.bf16.mxu0 0
        %494 = vmatpush1.bf16.msra.mxu0 0
        %495 = vmatprep.subr.bf16.mxu0 0
        %496 = vmatpush1.bf16.msra.mxu0 0
        %497 = vmatprep.mubr.bf16.mxu0 0
        %498 = vmatmul.mubr.bf16.gmra.mrb[0].mxu0 %v454
        %v499 = vpop.f32.mrb[0].mxu0
        %v500 = vadd.f32 0.0, %v499
        %v501 = vpop.f32.mrb[0].mxu0
        %v502 = vpop.f32.mrb[0].mxu0
        %v503 = vadd.f32 0.0, %v502
        %v504 = vpop.f32.mrb[0].mxu0
        %505 = vmatprep.mubr.bf16.mxu0 0
        %506 = vmatmul.mubr.bf16.gmra.mrb[0].mxu0 %v457
        %v507 = vpop.f32.mrb[0].mxu0
        %v508 = vadd.f32 0.0, %v507
        %v509 = vpop.f32.mrb[0].mxu0
        %v510 = vpop.f32.mrb[0].mxu0
        %v511 = vadd.f32 0.0, %v510
        %v512 = vpop.f32.mrb[0].mxu0
        %513 = vmatprep.mubr.bf16.mxu0 0
        %514 = vmatmul.mubr.bf16.gmra.mrb[0].mxu0 %v460
        %v515 = vpop.f32.mrb[0].mxu0
        %v516 = vadd.f32 0.0, %v515
        %v517 = vpop.f32.mrb[0].mxu0
        %v518 = vpop.f32.mrb[0].mxu0
        %v519 = vadd.f32 0.0, %v518
        %v520 = vpop.f32.mrb[0].mxu0
        %521 = vmatprep.mubr.bf16.mxu0 0
        %522 = vmatmul.mubr.bf16.gmra.mrb[0].mxu0 %v463
        %v523 = vpop.f32.mrb[0].mxu0
        %v524 = vadd.f32 0.0, %v523
        %v525 = vpop.f32.mrb[0].mxu0
        %v526 = vpop.f32.mrb[0].mxu0
        %v527 = vadd.f32 0.0, %v526
        %v528 = vpop.f32.mrb[0].mxu0
        %529 = vdwg.mxu0
        %v538 = vunpack.c.l.b16 %v352
        %v539 = vunpack.c.l.b16 %v353
        %v540 = vunpack.c.l.b16 %v354
        %v541 = vunpack.c.l.b16 %v355
        %v542 = vunpack.c.l.b16 %v356
        %v543 = vunpack.c.l.b16 %v357
        %v544 = vunpack.c.l.b16 %v358
        %v545 = vunpack.c.l.b16 %v359
        %v546 = vpack.c.b16 %v539, %v538
        %v547 = vpack.c.b16 %v541, %v540
        %v548 = vpack.c.b16 %v543, %v542
        %v549 = vpack.c.b16 %v545, %v544
        %v558 = vunpack.c.l.b16 %v384
        %v559 = vunpack.c.l.b16 %v385
        %v560 = vunpack.c.l.b16 %v386
        %v561 = vunpack.c.l.b16 %v387
        %v562 = vunpack.c.l.b16 %v388
        %v563 = vunpack.c.l.b16 %v389
        %v564 = vunpack.c.l.b16 %v390
        %v565 = vunpack.c.l.b16 %v391
        %v566 = vpack.c.b16 %v559, %v558
        %v567 = vpack.c.b16 %v561, %v560
        %v568 = vpack.c.b16 %v563, %v562
        %v569 = vpack.c.b16 %v565, %v564
        %v575 = vsel %vm452, %v546, 0
        %v578 = vsel %vm452, %v547, 0
        %v581 = vsel %vm452, %v548, 0
        %v584 = vsel %vm452, %v549, 0
        %586 = vmatprep.subr.bf16.mxu0 0
        %587 = vmatpush1.bf16.msra.mxu0 %v566
        %588 = vmatprep.subr.bf16.mxu0 0
        %589 = vmatpush1.bf16.msra.mxu0 %v567
        %590 = vmatprep.subr.bf16.mxu0 0
        %591 = vmatpush1.bf16.msra.mxu0 %v568
        %592 = vmatprep.subr.bf16.mxu0 0
        %593 = vmatpush1.bf16.msra.mxu0 %v569
        %594 = vmatprep.subr.bf16.mxu0 0
        %595 = vmatpush1.bf16.msra.mxu0 0
        %596 = vmatprep.subr.bf16.mxu0 0
        %597 = vmatpush1.bf16.msra.mxu0 0
        %598 = vmatprep.subr.bf16.mxu0 0
        %599 = vmatpush1.bf16.msra.mxu0 0
        %600 = vmatprep.subr.bf16.mxu0 0
        %601 = vmatpush1.bf16.msra.mxu0 0
        %602 = vmatprep.subr.bf16.mxu0 0
        %603 = vmatpush1.bf16.msra.mxu0 0
        %604 = vmatprep.subr.bf16.mxu0 0
        %605 = vmatpush1.bf16.msra.mxu0 0
        %606 = vmatprep.subr.bf16.mxu0 0
        %607 = vmatpush1.bf16.msra.mxu0 0
        %608 = vmatprep.subr.bf16.mxu0 0
        %609 = vmatpush1.bf16.msra.mxu0 0
        %610 = vmatprep.subr.bf16.mxu0 0
        %611 = vmatpush1.bf16.msra.mxu0 0
        %612 = vmatprep.subr.bf16.mxu0 0
        %613 = vmatpush1.bf16.msra.mxu0 0
        %614 = vmatprep.subr.bf16.mxu0 0
        %615 = vmatpush1.bf16.msra.mxu0 0
        %616 = vmatprep.subr.bf16.mxu0 0
        %617 = vmatpush1.bf16.msra.mxu0 0
        %618 = vmatprep.mubr.bf16.mxu0 0
        %619 = vmatmul.mubr.bf16.gmra.mrb[0].mxu0 %v575
        %v620 = vpop.f32.mrb[0].mxu0
        %v621 = vadd.f32 0.0, %v620
        %v622 = vpop.f32.mrb[0].mxu0
        %v623 = vpop.f32.mrb[0].mxu0
        %v624 = vadd.f32 0.0, %v623
        %v625 = vpop.f32.mrb[0].mxu0
        %626 = vmatprep.mubr.bf16.mxu0 0
        %627 = vmatmul.mubr.bf16.gmra.mrb[0].mxu0 %v578
        %v628 = vpop.f32.mrb[0].mxu0
        %v629 = vadd.f32 0.0, %v628
        %v630 = vpop.f32.mrb[0].mxu0
        %v631 = vpop.f32.mrb[0].mxu0
        %v632 = vadd.f32 0.0, %v631
        %v633 = vpop.f32.mrb[0].mxu0
        %634 = vmatprep.mubr.bf16.mxu0 0
        %635 = vmatmul.mubr.bf16.gmra.mrb[0].mxu0 %v581
        %v636 = vpop.f32.mrb[0].mxu0
        %v637 = vadd.f32 0.0, %v636
        %v638 = vpop.f32.mrb[0].mxu0
        %v639 = vpop.f32.mrb[0].mxu0
        %v640 = vadd.f32 0.0, %v639
        %v641 = vpop.f32.mrb[0].mxu0
        %642 = vmatprep.mubr.bf16.mxu0 0
        %643 = vmatmul.mubr.bf16.gmra.mrb[0].mxu0 %v584
        %v644 = vpop.f32.mrb[0].mxu0
        %v645 = vadd.f32 0.0, %v644
        %v646 = vpop.f32.mrb[0].mxu0
        %v647 = vpop.f32.mrb[0].mxu0
        %v648 = vadd.f32 0.0, %v647
        %v649 = vpop.f32.mrb[0].mxu0
        %650 = vdwg.mxu0
        %v659 = vunpack.c.l.b16 %v360
        %v660 = vunpack.c.l.b16 %v361
        %v661 = vunpack.c.l.b16 %v362
        %v662 = vunpack.c.l.b16 %v363
        %v663 = vunpack.c.l.b16 %v364
        %v664 = vunpack.c.l.b16 %v365
        %v665 = vunpack.c.l.b16 %v366
        %v666 = vunpack.c.l.b16 %v367
        %v667 = vpack.c.b16 %v660, %v659
        %v668 = vpack.c.b16 %v662, %v661
        %v669 = vpack.c.b16 %v664, %v663
        %v670 = vpack.c.b16 %v666, %v665
        %v679 = vunpack.c.l.b16 %v392
        %v680 = vunpack.c.l.b16 %v393
        %v681 = vunpack.c.l.b16 %v394
        %v682 = vunpack.c.l.b16 %v395
        %v683 = vunpack.c.l.b16 %v396
        %v684 = vunpack.c.l.b16 %v397
        %v685 = vunpack.c.l.b16 %v398
        %v686 = vunpack.c.l.b16 %v399
        %v687 = vpack.c.b16 %v680, %v679
        %v688 = vpack.c.b16 %v682, %v681
        %v689 = vpack.c.b16 %v684, %v683
        %v690 = vpack.c.b16 %v686, %v685
        %v696 = vsel %vm452, %v667, 0
        %v699 = vsel %vm452, %v668, 0
        %v702 = vsel %vm452, %v669, 0
        %v705 = vsel %vm452, %v670, 0
        %707 = vmatprep.subr.bf16.mxu0 0
        %708 = vmatpush1.bf16.msra.mxu0 %v687
        %709 = vmatprep.subr.bf16.mxu0 0
        %710 = vmatpush1.bf16.msra.mxu0 %v688
        %711 = vmatprep.subr.bf16.mxu0 0
        %712 = vmatpush1.bf16.msra.mxu0 %v689
        %713 = vmatprep.subr.bf16.mxu0 0
        %714 = vmatpush1.bf16.msra.mxu0 %v690
        %715 = vmatprep.subr.bf16.mxu0 0
        %716 = vmatpush1.bf16.msra.mxu0 0
        %717 = vmatprep.subr.bf16.mxu0 0
        %718 = vmatpush1.bf16.msra.mxu0 0
        %719 = vmatprep.subr.bf16.mxu0 0
        %720 = vmatpush1.bf16.msra.mxu0 0
        %721 = vmatprep.subr.bf16.mxu0 0
        %722 = vmatpush1.bf16.msra.mxu0 0
        %723 = vmatprep.subr.bf16.mxu0 0
        %724 = vmatpush1.bf16.msra.mxu0 0
        %725 = vmatprep.subr.bf16.mxu0 0
        %726 = vmatpush1.bf16.msra.mxu0 0
        %727 = vmatprep.subr.bf16.mxu0 0
        %728 = vmatpush1.bf16.msra.mxu0 0
        %729 = vmatprep.subr.bf16.mxu0 0
        %730 = vmatpush1.bf16.msra.mxu0 0
        %731 = vmatprep.subr.bf16.mxu0 0
        %732 = vmatpush1.bf16.msra.mxu0 0
        %733 = vmatprep.subr.bf16.mxu0 0
        %734 = vmatpush1.bf16.msra.mxu0 0
        %735 = vmatprep.subr.bf16.mxu0 0
        %736 = vmatpush1.bf16.msra.mxu0 0
        %737 = vmatprep.subr.bf16.mxu0 0
        %738 = vmatpush1.bf16.msra.mxu0 0
        %739 = vmatprep.mubr.bf16.mxu0 0
        %740 = vmatmul.mubr.bf16.gmra.mrb[0].mxu0 %v696
        %v741 = vpop.f32.mrb[0].mxu0
        %v742 = vadd.f32 0.0, %v741
        %v743 = vpop.f32.mrb[0].mxu0
        %v744 = vpop.f32.mrb[0].mxu0
        %v745 = vadd.f32 0.0, %v744
        %v746 = vpop.f32.mrb[0].mxu0
        %747 = vmatprep.mubr.bf16.mxu0 0
        %748 = vmatmul.mubr.bf16.gmra.mrb[0].mxu0 %v699
        %v749 = vpop.f32.mrb[0].mxu0
        %v750 = vadd.f32 0.0, %v749
        %v751 = vpop.f32.mrb[0].mxu0
        %v752 = vpop.f32.mrb[0].mxu0
        %v753 = vadd.f32 0.0, %v752
        %v754 = vpop.f32.mrb[0].mxu0
        %755 = vmatprep.mubr.bf16.mxu0 0
        %756 = vmatmul.mubr.bf16.gmra.mrb[0].mxu0 %v702
        %v757 = vpop.f32.mrb[0].mxu0
        %v758 = vadd.f32 0.0, %v757
        %v759 = vpop.f32.mrb[0].mxu0
        %v760 = vpop.f32.mrb[0].mxu0
        %v761 = vadd.f32 0.0, %v760
        %v762 = vpop.f32.mrb[0].mxu0
        %763 = vmatprep.mubr.bf16.mxu0 0
        %764 = vmatmul.mubr.bf16.gmra.mrb[0].mxu0 %v705
        %v765 = vpop.f32.mrb[0].mxu0
        %v766 = vadd.f32 0.0, %v765
        %v767 = vpop.f32.mrb[0].mxu0
        %v768 = vpop.f32.mrb[0].mxu0
        %v769 = vadd.f32 0.0, %v768
        %v770 = vpop.f32.mrb[0].mxu0
        %771 = vdwg.mxu0
        %v780 = vunpack.c.l.b16 %v368
        %v781 = vunpack.c.l.b16 %v369
        %v782 = vunpack.c.l.b16 %v370
        %v783 = vunpack.c.l.b16 %v371
        %v784 = vunpack.c.l.b16 %v372
        %v785 = vunpack.c.l.b16 %v373
        %v786 = vunpack.c.l.b16 %v374
        %v787 = vunpack.c.l.b16 %v375
        %v788 = vpack.c.b16 %v781, %v780
        %v789 = vpack.c.b16 %v783, %v782
        %v790 = vpack.c.b16 %v785, %v784
        %v791 = vpack.c.b16 %v787, %v786
        %v800 = vunpack.c.l.b16 %v400
        %v801 = vunpack.c.l.b16 %v401
        %v802 = vunpack.c.l.b16 %v402
        %v803 = vunpack.c.l.b16 %v403
        %v804 = vunpack.c.l.b16 %v404
        %v805 = vunpack.c.l.b16 %v405
        %v806 = vunpack.c.l.b16 %v406
        %v807 = vunpack.c.l.b16 %v407
        %v808 = vpack.c.b16 %v801, %v800
        %v809 = vpack.c.b16 %v803, %v802
        %v810 = vpack.c.b16 %v805, %v804
        %v811 = vpack.c.b16 %v807, %v806
        %v817 = vsel %vm452, %v788, 0
        %v820 = vsel %vm452, %v789, 0
        %v823 = vsel %vm452, %v790, 0
        %v826 = vsel %vm452, %v791, 0
        %828 = vmatprep.subr.bf16.mxu0 0
        %829 = vmatpush1.bf16.msra.mxu0 %v808
        %830 = vmatprep.subr.bf16.mxu0 0
        %831 = vmatpush1.bf16.msra.mxu0 %v809
        %832 = vmatprep.subr.bf16.mxu0 0
        %833 = vmatpush1.bf16.msra.mxu0 %v810
        %834 = vmatprep.subr.bf16.mxu0 0
        %835 = vmatpush1.bf16.msra.mxu0 %v811
        %836 = vmatprep.subr.bf16.mxu0 0
        %837 = vmatpush1.bf16.msra.mxu0 0
        %838 = vmatprep.subr.bf16.mxu0 0
        %839 = vmatpush1.bf16.msra.mxu0 0
        %840 = vmatprep.subr.bf16.mxu0 0
        %841 = vmatpush1.bf16.msra.mxu0 0
        %842 = vmatprep.subr.bf16.mxu0 0
        %843 = vmatpush1.bf16.msra.mxu0 0
        %844 = vmatprep.subr.bf16.mxu0 0
        %845 = vmatpush1.bf16.msra.mxu0 0
        %846 = vmatprep.subr.bf16.mxu0 0
        %847 = vmatpush1.bf16.msra.mxu0 0
        %848 = vmatprep.subr.bf16.mxu0 0
        %849 = vmatpush1.bf16.msra.mxu0 0
        %850 = vmatprep.subr.bf16.mxu0 0
        %851 = vmatpush1.bf16.msra.mxu0 0
        %852 = vmatprep.subr.bf16.mxu0 0
        %853 = vmatpush1.bf16.msra.mxu0 0
        %854 = vmatprep.subr.bf16.mxu0 0
        %855 = vmatpush1.bf16.msra.mxu0 0
        %856 = vmatprep.subr.bf16.mxu0 0
        %857 = vmatpush1.bf16.msra.mxu0 0
        %858 = vmatprep.subr.bf16.mxu0 0
        %859 = vmatpush1.bf16.msra.mxu0 0
        %860 = vmatprep.mubr.bf16.mxu0 0
        %861 = vmatmul.mubr.bf16.gmra.mrb[0].mxu0 %v817
        %v862 = vpop.f32.mrb[0].mxu0
        %v863 = vadd.f32 0.0, %v862
        %v864 = vpop.f32.mrb[0].mxu0
        %v865 = vpop.f32.mrb[0].mxu0
        %v866 = vadd.f32 0.0, %v865
        %v867 = vpop.f32.mrb[0].mxu0
        %868 = vmatprep.mubr.bf16.mxu0 0
        %869 = vmatmul.mubr.bf16.gmra.mrb[0].mxu0 %v820
        %v870 = vpop.f32.mrb[0].mxu0
        %v871 = vadd.f32 0.0, %v870
        %v872 = vpop.f32.mrb[0].mxu0
        %v873 = vpop.f32.mrb[0].mxu0
        %v874 = vadd.f32 0.0, %v873
        %v875 = vpop.f32.mrb[0].mxu0
        %876 = vmatprep.mubr.bf16.mxu0 0
        %877 = vmatmul.mubr.bf16.gmra.mrb[0].mxu0 %v823
        %v878 = vpop.f32.mrb[0].mxu0
        %v879 = vadd.f32 0.0, %v878
        %v880 = vpop.f32.mrb[0].mxu0
        %v881 = vpop.f32.mrb[0].mxu0
        %v882 = vadd.f32 0.0, %v881
        %v883 = vpop.f32.mrb[0].mxu0
        %884 = vmatprep.mubr.bf16.mxu0 0
        %885 = vmatmul.mubr.bf16.gmra.mrb[0].mxu0 %v826
        %v886 = vpop.f32.mrb[0].mxu0
        %v887 = vadd.f32 0.0, %v886
        %v888 = vpop.f32.mrb[0].mxu0
        %v889 = vpop.f32.mrb[0].mxu0
        %v890 = vadd.f32 0.0, %v889
        %v891 = vpop.f32.mrb[0].mxu0
        %892 = vdwg.mxu0
        %v893 = vpack.c.bf16 %v503, %v500
        %v894 = vpack.c.bf16 %v511, %v508
        %v895 = vpack.c.bf16 %v519, %v516
        %v896 = vpack.c.bf16 %v527, %v524
        %v897 = vpack.c.bf16 %v624, %v621
        %v898 = vpack.c.bf16 %v632, %v629
        %v899 = vpack.c.bf16 %v640, %v637
        %v900 = vpack.c.bf16 %v648, %v645
        %v901 = vpack.c.bf16 %v745, %v742
        %v902 = vpack.c.bf16 %v753, %v750
        %v903 = vpack.c.bf16 %v761, %v758
        %v904 = vpack.c.bf16 %v769, %v766
        %v905 = vpack.c.bf16 %v866, %v863
        %v906 = vpack.c.bf16 %v874, %v871
        %v907 = vpack.c.bf16 %v882, %v879
        %v908 = vpack.c.bf16 %v890, %v887
        %v909 = vld [vmem:[#allocation7] sm:$0xf]
        %v910 = vld [vmem:[#allocation7 + $0x4] sm:$0xf]
        %v911 = vld [vmem:[#allocation7 + $0x8] sm:$0xf]
        %v912 = vld [vmem:[#allocation7 + $0xc] sm:$0xf]
        %v913 = vld [vmem:[#allocation7 + $0x10] sm:$0xf]
        %v914 = vld [vmem:[#allocation7 + $0x14] sm:$0xf]
        %v915 = vld [vmem:[#allocation7 + $0x18] sm:$0xf]
        %v916 = vld [vmem:[#allocation7 + $0x1c] sm:$0xf]
        %v917 = vld [vmem:[#allocation7 + $0x20] sm:$0xf]
        %v918 = vld [vmem:[#allocation7 + $0x24] sm:$0xf]
        %v919 = vld [vmem:[#allocation7 + $0x28] sm:$0xf]
        %v920 = vld [vmem:[#allocation7 + $0x2c] sm:$0xf]
        %v921 = vld [vmem:[#allocation7 + $0x30] sm:$0xf]
        %v922 = vld [vmem:[#allocation7 + $0x34] sm:$0xf]
        %v923 = vld [vmem:[#allocation7 + $0x38] sm:$0xf]
        %v924 = vld [vmem:[#allocation7 + $0x3c] sm:$0xf]
        %v925 = vld [vmem:[%s3] sm:$0x1]
        %v927 = vlaneseq
        %v928 = vshrl.u32 %v927, 7
        %v929 = vsub.s32 0, %v928
        %v930 = vrot.slane %v925, %v929
        %v948 = vunpack.c.l.b16 %v909
        %v949 = vunpack.c.l.b16 %v910
        %v950 = vunpack.c.l.b16 %v911
        %v951 = vunpack.c.l.b16 %v912
        %v952 = vunpack.c.l.b16 %v913
        %v953 = vunpack.c.l.b16 %v914
        %v954 = vunpack.c.l.b16 %v915
        %v955 = vunpack.c.l.b16 %v916
        %v956 = vunpack.c.l.b16 %v917
        %v957 = vunpack.c.l.b16 %v918
        %v958 = vunpack.c.l.b16 %v919
        %v959 = vunpack.c.l.b16 %v920
        %v960 = vunpack.c.l.b16 %v921
        %v961 = vunpack.c.l.b16 %v922
        %v962 = vunpack.c.l.b16 %v923
        %v963 = vunpack.c.l.b16 %v924
        %v964 = vpack.c.b16 %v949, %v948
        %v965 = vpack.c.b16 %v951, %v950
        %v966 = vpack.c.b16 %v953, %v952
        %v967 = vpack.c.b16 %v955, %v954
        %v968 = vpack.c.b16 %v957, %v956
        %v969 = vpack.c.b16 %v959, %v958
        %v970 = vpack.c.b16 %v961, %v960
        %v971 = vpack.c.b16 %v963, %v962
        %980 = vmatprep.subr.bf16.mxu0 0
        %981 = vmatpush1.bf16.msra.mxu0 %v964
        %982 = vmatprep.subr.bf16.mxu0 0
        %983 = vmatpush1.bf16.msra.mxu0 %v965
        %984 = vmatprep.subr.bf16.mxu0 0
        %985 = vmatpush1.bf16.msra.mxu0 %v966
        %986 = vmatprep.subr.bf16.mxu0 0
        %987 = vmatpush1.bf16.msra.mxu0 %v967
        %988 = vmatprep.subr.bf16.mxu0 0
        %989 = vmatpush1.bf16.msra.mxu0 %v968
        %990 = vmatprep.subr.bf16.mxu0 0
        %991 = vmatpush1.bf16.msra.mxu0 %v969
        %992 = vmatprep.subr.bf16.mxu0 0
        %993 = vmatpush1.bf16.msra.mxu0 %v970
        %994 = vmatprep.subr.bf16.mxu0 0
        %995 = vmatpush1.bf16.msra.mxu0 %v971
        %996 = vmatprep.subr.bf16.mxu0 0
        %997 = vmatpush1.bf16.msra.mxu0 0
        %998 = vmatprep.subr.bf16.mxu0 0
        %999 = vmatpush1.bf16.msra.mxu0 0
        %1000 = vmatprep.subr.bf16.mxu0 0
        %1001 = vmatpush1.bf16.msra.mxu0 0
        %1002 = vmatprep.subr.bf16.mxu0 0
        %1003 = vmatpush1.bf16.msra.mxu0 0
        %1004 = vmatprep.subr.bf16.mxu0 0
        %1005 = vmatpush1.bf16.msra.mxu0 0
        %1006 = vmatprep.subr.bf16.mxu0 0
        %1007 = vmatpush1.bf16.msra.mxu0 0
        %1008 = vmatprep.subr.bf16.mxu0 0
        %1009 = vmatpush1.bf16.msra.mxu0 0
        %1010 = vmatprep.subr.bf16.mxu0 0
        %1011 = vmatpush1.bf16.msra.mxu0 0
        %1012 = vmatprep.mubr.bf16.mxu0 0
        %1013 = vmatmul.mubr.bf16.gmra.mrb[0].mxu0 %v893
        %v1014 = vpop.f32.mrb[0].mxu0
        %v1015 = vadd.f32 %v930, %v1014
        %v1016 = vpop.f32.mrb[0].mxu0
        %v1017 = vpop.f32.mrb[0].mxu0
        %v1018 = vadd.f32 %v930, %v1017
        %v1019 = vpop.f32.mrb[0].mxu0
        %1020 = vmatprep.mubr.bf16.mxu0 0
        %1021 = vmatmul.mubr.bf16.gmra.mrb[0].mxu0 %v894
        %v1022 = vpop.f32.mrb[0].mxu0
        %v1023 = vadd.f32 %v930, %v1022
        %v1024 = vpop.f32.mrb[0].mxu0
        %v1025 = vpop.f32.mrb[0].mxu0
        %v1026 = vadd.f32 %v930, %v1025
        %v1027 = vpop.f32.mrb[0].mxu0
        %1028 = vmatprep.mubr.bf16.mxu0 0
        %1029 = vmatmul.mubr.bf16.gmra.mrb[0].mxu0 %v895
        %v1030 = vpop.f32.mrb[0].mxu0
        %v1031 = vadd.f32 %v930, %v1030
        %v1032 = vpop.f32.mrb[0].mxu0
        %v1033 = vpop.f32.mrb[0].mxu0
        %v1034 = vadd.f32 %v930, %v1033
        %v1035 = vpop.f32.mrb[0].mxu0
        %1036 = vmatprep.mubr.bf16.mxu0 0
        %1037 = vmatmul.mubr.bf16.gmra.mrb[0].mxu0 %v896
        %v1038 = vpop.f32.mrb[0].mxu0
        %v1039 = vadd.f32 %v930, %v1038
        %v1040 = vpop.f32.mrb[0].mxu0
        %v1041 = vpop.f32.mrb[0].mxu0
        %v1042 = vadd.f32 %v930, %v1041
        %v1043 = vpop.f32.mrb[0].mxu0
        %1044 = vmatprep.mubr.bf16.mxu0 0
        %1045 = vmatmul.mubr.bf16.gmra.mrb[0].mxu0 %v897
        %v1046 = vpop.f32.mrb[0].mxu0
        %v1047 = vadd.f32 %v930, %v1046
        %v1048 = vpop.f32.mrb[0].mxu0
        %v1049 = vpop.f32.mrb[0].mxu0
        %v1050 = vadd.f32 %v930, %v1049
        %v1051 = vpop.f32.mrb[0].mxu0
        %1052 = vmatprep.mubr.bf16.mxu0 0
        %1053 = vmatmul.mubr.bf16.gmra.mrb[0].mxu0 %v898
        %v1054 = vpop.f32.mrb[0].mxu0
        %v1055 = vadd.f32 %v930, %v1054
        %v1056 = vpop.f32.mrb[0].mxu0
        %v1057 = vpop.f32.mrb[0].mxu0
        %v1058 = vadd.f32 %v930, %v1057
        %v1059 = vpop.f32.mrb[0].mxu0
        %1060 = vmatprep.mubr.bf16.mxu0 0
        %1061 = vmatmul.mubr.bf16.gmra.mrb[0].mxu0 %v899
        %v1062 = vpop.f32.mrb[0].mxu0
        %v1063 = vadd.f32 %v930, %v1062
        %v1064 = vpop.f32.mrb[0].mxu0
        %v1065 = vpop.f32.mrb[0].mxu0
        %v1066 = vadd.f32 %v930, %v1065
        %v1067 = vpop.f32.mrb[0].mxu0
        %1068 = vmatprep.mubr.bf16.mxu0 0
        %1069 = vmatmul.mubr.bf16.gmra.mrb[0].mxu0 %v900
        %v1070 = vpop.f32.mrb[0].mxu0
        %v1071 = vadd.f32 %v930, %v1070
        %v1072 = vpop.f32.mrb[0].mxu0
        %v1073 = vpop.f32.mrb[0].mxu0
        %v1074 = vadd.f32 %v930, %v1073
        %v1075 = vpop.f32.mrb[0].mxu0
        %1076 = vmatprep.mubr.bf16.mxu0 0
        %1077 = vmatmul.mubr.bf16.gmra.mrb[0].mxu0 %v901
        %v1078 = vpop.f32.mrb[0].mxu0
        %v1079 = vadd.f32 %v930, %v1078
        %v1080 = vpop.f32.mrb[0].mxu0
        %v1081 = vpop.f32.mrb[0].mxu0
        %v1082 = vadd.f32 %v930, %v1081
        %v1083 = vpop.f32.mrb[0].mxu0
        %1084 = vmatprep.mubr.bf16.mxu0 0
        %1085 = vmatmul.mubr.bf16.gmra.mrb[0].mxu0 %v902
        %v1086 = vpop.f32.mrb[0].mxu0
        %v1087 = vadd.f32 %v930, %v1086
        %v1088 = vpop.f32.mrb[0].mxu0
        %v1089 = vpop.f32.mrb[0].mxu0
        %v1090 = vadd.f32 %v930, %v1089
        %v1091 = vpop.f32.mrb[0].mxu0
        %1092 = vmatprep.mubr.bf16.mxu0 0
        %1093 = vmatmul.mubr.bf16.gmra.mrb[0].mxu0 %v903
        %v1094 = vpop.f32.mrb[0].mxu0
        %v1095 = vadd.f32 %v930, %v1094
        %v1096 = vpop.f32.mrb[0].mxu0
        %v1097 = vpop.f32.mrb[0].mxu0
        %v1098 = vadd.f32 %v930, %v1097
        %v1099 = vpop.f32.mrb[0].mxu0
        %1100 = vmatprep.mubr.bf16.mxu0 0
        %1101 = vmatmul.mubr.bf16.gmra.mrb[0].mxu0 %v904
        %v1102 = vpop.f32.mrb[0].mxu0
        %v1103 = vadd.f32 %v930, %v1102
        %v1104 = vpop.f32.mrb[0].mxu0
        %v1105 = vpop.f32.mrb[0].mxu0
        %v1106 = vadd.f32 %v930, %v1105
        %v1107 = vpop.f32.mrb[0].mxu0
        %1108 = vmatprep.mubr.bf16.mxu0 0
        %1109 = vmatmul.mubr.bf16.gmra.mrb[0].mxu0 %v905
        %v1110 = vpop.f32.mrb[0].mxu0
        %v1111 = vadd.f32 %v930, %v1110
        %v1112 = vpop.f32.mrb[0].mxu0
        %v1113 = vpop.f32.mrb[0].mxu0
        %v1114 = vadd.f32 %v930, %v1113
        %v1115 = vpop.f32.mrb[0].mxu0
        %1116 = vmatprep.mubr.bf16.mxu0 0
        %1117 = vmatmul.mubr.bf16.gmra.mrb[0].mxu0 %v906
        %v1118 = vpop.f32.mrb[0].mxu0
        %v1119 = vadd.f32 %v930, %v1118
        %v1120 = vpop.f32.mrb[0].mxu0
        %v1121 = vpop.f32.mrb[0].mxu0
        %v1122 = vadd.f32 %v930, %v1121
        %v1123 = vpop.f32.mrb[0].mxu0
        %1124 = vmatprep.mubr.bf16.mxu0 0
        %1125 = vmatmul.mubr.bf16.gmra.mrb[0].mxu0 %v907
        %v1126 = vpop.f32.mrb[0].mxu0
        %v1127 = vadd.f32 %v930, %v1126
        %v1128 = vpop.f32.mrb[0].mxu0
        %v1129 = vpop.f32.mrb[0].mxu0
        %v1130 = vadd.f32 %v930, %v1129
        %v1131 = vpop.f32.mrb[0].mxu0
        %1132 = vmatprep.mubr.bf16.mxu0 0
        %1133 = vmatmul.mubr.bf16.gmra.mrb[0].mxu0 %v908
        %v1134 = vpop.f32.mrb[0].mxu0
        %v1135 = vadd.f32 %v930, %v1134
        %v1136 = vpop.f32.mrb[0].mxu0
        %v1137 = vpop.f32.mrb[0].mxu0
        %v1138 = vadd.f32 %v930, %v1137
        %v1139 = vpop.f32.mrb[0].mxu0
        %1140 = vdwg.mxu0
        %v1141 = vmax.f32 %v1015, 0.0
        %v1142 = vmax.f32 %v1018, 0.0
        %v1143 = vmax.f32 %v1023, 0.0
        %v1144 = vmax.f32 %v1026, 0.0
        %v1145 = vmax.f32 %v1031, 0.0
        %v1146 = vmax.f32 %v1034, 0.0
        %v1147 = vmax.f32 %v1039, 0.0
        %v1148 = vmax.f32 %v1042, 0.0
        %v1149 = vmax.f32 %v1047, 0.0
        %v1150 = vmax.f32 %v1050, 0.0
        %v1151 = vmax.f32 %v1055, 0.0
        %v1152 = vmax.f32 %v1058, 0.0
        %v1153 = vmax.f32 %v1063, 0.0
        %v1154 = vmax.f32 %v1066, 0.0
        %v1155 = vmax.f32 %v1071, 0.0
        %v1156 = vmax.f32 %v1074, 0.0
        %v1157 = vmax.f32 %v1079, 0.0
        %v1158 = vmax.f32 %v1082, 0.0
        %v1159 = vmax.f32 %v1087, 0.0
        %v1160 = vmax.f32 %v1090, 0.0
        %v1161 = vmax.f32 %v1095, 0.0
        %v1162 = vmax.f32 %v1098, 0.0
        %v1163 = vmax.f32 %v1103, 0.0
        %v1164 = vmax.f32 %v1106, 0.0
        %v1165 = vmax.f32 %v1111, 0.0
        %v1166 = vmax.f32 %v1114, 0.0
        %v1167 = vmax.f32 %v1119, 0.0
        %v1168 = vmax.f32 %v1122, 0.0
        %v1169 = vmax.f32 %v1127, 0.0
        %v1170 = vmax.f32 %v1130, 0.0
        %v1171 = vmax.f32 %v1135, 0.0
        %v1172 = vmax.f32 %v1138, 0.0
        %v1173 = vpack.c.bf16 %v1142, %v1141
        %v1174 = vpack.c.bf16 %v1144, %v1143
        %v1175 = vpack.c.bf16 %v1146, %v1145
        %v1176 = vpack.c.bf16 %v1148, %v1147
        %v1177 = vpack.c.bf16 %v1150, %v1149
        %v1178 = vpack.c.bf16 %v1152, %v1151
        %v1179 = vpack.c.bf16 %v1154, %v1153
        %v1180 = vpack.c.bf16 %v1156, %v1155
        %v1181 = vpack.c.bf16 %v1158, %v1157
        %v1182 = vpack.c.bf16 %v1160, %v1159
        %v1183 = vpack.c.bf16 %v1162, %v1161
        %v1184 = vpack.c.bf16 %v1164, %v1163
        %v1185 = vpack.c.bf16 %v1166, %v1165
        %v1186 = vpack.c.bf16 %v1168, %v1167
        %v1187 = vpack.c.bf16 %v1170, %v1169
        %v1188 = vpack.c.bf16 %v1172, %v1171
        %1189 = vmatprep.subr.bf16.mxu0 0
        %1190 = vmatpush1.bf16.msra.mxu0 %v1173
        %1191 = vmatprep.subr.bf16.mxu0 0
        %1192 = vmatpush1.bf16.msra.mxu0 %v1174
        %1193 = vmatprep.subr.bf16.mxu0 0
        %1194 = vmatpush1.bf16.msra.mxu0 %v1175
        %1195 = vmatprep.subr.bf16.mxu0 0
        %1196 = vmatpush1.bf16.msra.mxu0 %v1176
        %1197 = vmatprep.subr.bf16.mxu0 0
        %1198 = vmatpush1.bf16.msra.mxu0 0
        %1199 = vmatprep.subr.bf16.mxu0 0
        %1200 = vmatpush1.bf16.msra.mxu0 0
        %1201 = vmatprep.subr.bf16.mxu0 0
        %1202 = vmatpush1.bf16.msra.mxu0 0
        %1203 = vmatprep.subr.bf16.mxu0 0
        %1204 = vmatpush1.bf16.msra.mxu0 0
        %1205 = vmatprep.subr.bf16.mxu0 0
        %1206 = vmatpush1.bf16.msra.mxu0 0
        %1207 = vmatprep.subr.bf16.mxu0 0
        %1208 = vmatpush1.bf16.msra.mxu0 0
        %1209 = vmatprep.subr.bf16.mxu0 0
        %1210 = vmatpush1.bf16.msra.mxu0 0
        %1211 = vmatprep.subr.bf16.mxu0 0
        %1212 = vmatpush1.bf16.msra.mxu0 0
        %1213 = vmatprep.subr.bf16.mxu0 0
        %1214 = vmatpush1.bf16.msra.mxu0 0
        %1215 = vmatprep.subr.bf16.mxu0 0
        %1216 = vmatpush1.bf16.msra.mxu0 0
        %1217 = vmatprep.subr.bf16.mxu0 0
        %1218 = vmatpush1.bf16.msra.mxu0 0
        %1219 = vmatprep.subr.bf16.mxu0 0
        %1220 = vmatpush1.bf16.msra.mxu0 0
        %1221 = vmatprep.mubr.bf16.mxu0 0
        %1222 = vmatmul.mubr.bf16.gmra.mrb[0].mxu0 %v454
        %v1223 = vpop.f32.mrb[0].mxu0
        %v1224 = vadd.f32 0.0, %v1223
        %v1225 = vpop.f32.mrb[0].mxu0
        %v1226 = vpop.f32.mrb[0].mxu0
        %v1227 = vadd.f32 0.0, %v1226
        %v1228 = vpop.f32.mrb[0].mxu0
        %1229 = vmatprep.mubr.bf16.mxu0 0
        %1230 = vmatmul.mubr.bf16.gmra.mrb[0].mxu0 %v457
        %v1231 = vpop.f32.mrb[0].mxu0
        %v1232 = vadd.f32 0.0, %v1231
        %v1233 = vpop.f32.mrb[0].mxu0
        %v1234 = vpop.f32.mrb[0].mxu0
        %v1235 = vadd.f32 0.0, %v1234
        %v1236 = vpop.f32.mrb[0].mxu0
        %1237 = vmatprep.mubr.bf16.mxu0 0
        %1238 = vmatmul.mubr.bf16.gmra.mrb[0].mxu0 %v460
        %v1239 = vpop.f32.mrb[0].mxu0
        %v1240 = vadd.f32 0.0, %v1239
        %v1241 = vpop.f32.mrb[0].mxu0
        %v1242 = vpop.f32.mrb[0].mxu0
        %v1243 = vadd.f32 0.0, %v1242
        %v1244 = vpop.f32.mrb[0].mxu0
        %1245 = vmatprep.mubr.bf16.mxu0 0
        %1246 = vmatmul.mubr.bf16.gmra.mrb[0].mxu0 %v463
        %v1247 = vpop.f32.mrb[0].mxu0
        %v1248 = vadd.f32 0.0, %v1247
        %v1249 = vpop.f32.mrb[0].mxu0
        %v1250 = vpop.f32.mrb[0].mxu0
        %v1251 = vadd.f32 0.0, %v1250
        %v1252 = vpop.f32.mrb[0].mxu0
        %1253 = vdwg.mxu0
        %1254 = vmatprep.subr.bf16.mxu0 0
        %1255 = vmatpush1.bf16.msra.mxu0 %v1177
        %1256 = vmatprep.subr.bf16.mxu0 0
        %1257 = vmatpush1.bf16.msra.mxu0 %v1178
        %1258 = vmatprep.subr.bf16.mxu0 0
        %1259 = vmatpush1.bf16.msra.mxu0 %v1179
        %1260 = vmatprep.subr.bf16.mxu0 0
        %1261 = vmatpush1.bf16.msra.mxu0 %v1180
        %1262 = vmatprep.subr.bf16.mxu0 0
        %1263 = vmatpush1.bf16.msra.mxu0 0
        %1264 = vmatprep.subr.bf16.mxu0 0
        %1265 = vmatpush1.bf16.msra.mxu0 0
        %1266 = vmatprep.subr.bf16.mxu0 0
        %1267 = vmatpush1.bf16.msra.mxu0 0
        %1268 = vmatprep.subr.bf16.mxu0 0
        %1269 = vmatpush1.bf16.msra.mxu0 0
        %1270 = vmatprep.subr.bf16.mxu0 0
        %1271 = vmatpush1.bf16.msra.mxu0 0
        %1272 = vmatprep.subr.bf16.mxu0 0
        %1273 = vmatpush1.bf16.msra.mxu0 0
        %1274 = vmatprep.subr.bf16.mxu0 0
        %1275 = vmatpush1.bf16.msra.mxu0 0
        %1276 = vmatprep.subr.bf16.mxu0 0
        %1277 = vmatpush1.bf16.msra.mxu0 0
        %1278 = vmatprep.subr.bf16.mxu0 0
        %1279 = vmatpush1.bf16.msra.mxu0 0
        %1280 = vmatprep.subr.bf16.mxu0 0
        %1281 = vmatpush1.bf16.msra.mxu0 0
        %1282 = vmatprep.subr.bf16.mxu0 0
        %1283 = vmatpush1.bf16.msra.mxu0 0
        %1284 = vmatprep.subr.bf16.mxu0 0
        %1285 = vmatpush1.bf16.msra.mxu0 0
        %1286 = vmatprep.mubr.bf16.mxu0 0
        %1287 = vmatmul.mubr.bf16.gmra.mrb[0].mxu0 %v575
        %v1288 = vpop.f32.mrb[0].mxu0
        %v1289 = vadd.f32 0.0, %v1288
        %v1290 = vpop.f32.mrb[0].mxu0
        %v1291 = vpop.f32.mrb[0].mxu0
        %v1292 = vadd.f32 0.0, %v1291
        %v1293 = vpop.f32.mrb[0].mxu0
        %1294 = vmatprep.mubr.bf16.mxu0 0
        %1295 = vmatmul.mubr.bf16.gmra.mrb[0].mxu0 %v578
        %v1296 = vpop.f32.mrb[0].mxu0
        %v1297 = vadd.f32 0.0, %v1296
        %v1298 = vpop.f32.mrb[0].mxu0
        %v1299 = vpop.f32.mrb[0].mxu0
        %v1300 = vadd.f32 0.0, %v1299
        %v1301 = vpop.f32.mrb[0].mxu0
        %1302 = vmatprep.mubr.bf16.mxu0 0
        %1303 = vmatmul.mubr.bf16.gmra.mrb[0].mxu0 %v581
        %v1304 = vpop.f32.mrb[0].mxu0
        %v1305 = vadd.f32 0.0, %v1304
        %v1306 = vpop.f32.mrb[0].mxu0
        %v1307 = vpop.f32.mrb[0].mxu0
        %v1308 = vadd.f32 0.0, %v1307
        %v1309 = vpop.f32.mrb[0].mxu0
        %1310 = vmatprep.mubr.bf16.mxu0 0
        %1311 = vmatmul.mubr.bf16.gmra.mrb[0].mxu0 %v584
        %v1312 = vpop.f32.mrb[0].mxu0
        %v1313 = vadd.f32 0.0, %v1312
        %v1314 = vpop.f32.mrb[0].mxu0
        %v1315 = vpop.f32.mrb[0].mxu0
        %v1316 = vadd.f32 0.0, %v1315
        %v1317 = vpop.f32.mrb[0].mxu0
        %1318 = vdwg.mxu0
        %1319 = vmatprep.subr.bf16.mxu0 0
        %1320 = vmatpush1.bf16.msra.mxu0 %v1181
        %1321 = vmatprep.subr.bf16.mxu0 0
        %1322 = vmatpush1.bf16.msra.mxu0 %v1182
        %1323 = vmatprep.subr.bf16.mxu0 0
        %1324 = vmatpush1.bf16.msra.mxu0 %v1183
        %1325 = vmatprep.subr.bf16.mxu0 0
        %1326 = vmatpush1.bf16.msra.mxu0 %v1184
        %1327 = vmatprep.subr.bf16.mxu0 0
        %1328 = vmatpush1.bf16.msra.mxu0 0
        %1329 = vmatprep.subr.bf16.mxu0 0
        %1330 = vmatpush1.bf16.msra.mxu0 0
        %1331 = vmatprep.subr.bf16.mxu0 0
        %1332 = vmatpush1.bf16.msra.mxu0 0
        %1333 = vmatprep.subr.bf16.mxu0 0
        %1334 = vmatpush1.bf16.msra.mxu0 0
        %1335 = vmatprep.subr.bf16.mxu0 0
        %1336 = vmatpush1.bf16.msra.mxu0 0
        %1337 = vmatprep.subr.bf16.mxu0 0
        %1338 = vmatpush1.bf16.msra.mxu0 0
        %1339 = vmatprep.subr.bf16.mxu0 0
        %1340 = vmatpush1.bf16.msra.mxu0 0
        %1341 = vmatprep.subr.bf16.mxu0 0
        %1342 = vmatpush1.bf16.msra.mxu0 0
        %1343 = vmatprep.subr.bf16.mxu0 0
        %1344 = vmatpush1.bf16.msra.mxu0 0
        %1345 = vmatprep.subr.bf16.mxu0 0
        %1346 = vmatpush1.bf16.msra.mxu0 0
        %1347 = vmatprep.subr.bf16.mxu0 0
        %1348 = vmatpush1.bf16.msra.mxu0 0
        %1349 = vmatprep.subr.bf16.mxu0 0
        %1350 = vmatpush1.bf16.msra.mxu0 0
        %1351 = vmatprep.mubr.bf16.mxu0 0
        %1352 = vmatmul.mubr.bf16.gmra.mrb[0].mxu0 %v696
        %v1353 = vpop.f32.mrb[0].mxu0
        %v1354 = vadd.f32 0.0, %v1353
        %v1355 = vpop.f32.mrb[0].mxu0
        %v1356 = vpop.f32.mrb[0].mxu0
        %v1357 = vadd.f32 0.0, %v1356
        %v1358 = vpop.f32.mrb[0].mxu0
        %1359 = vmatprep.mubr.bf16.mxu0 0
        %1360 = vmatmul.mubr.bf16.gmra.mrb[0].mxu0 %v699
        %v1361 = vpop.f32.mrb[0].mxu0
        %v1362 = vadd.f32 0.0, %v1361
        %v1363 = vpop.f32.mrb[0].mxu0
        %v1364 = vpop.f32.mrb[0].mxu0
        %v1365 = vadd.f32 0.0, %v1364
        %v1366 = vpop.f32.mrb[0].mxu0
        %1367 = vmatprep.mubr.bf16.mxu0 0
        %1368 = vmatmul.mubr.bf16.gmra.mrb[0].mxu0 %v702
        %v1369 = vpop.f32.mrb[0].mxu0
        %v1370 = vadd.f32 0.0, %v1369
        %v1371 = vpop.f32.mrb[0].mxu0
        %v1372 = vpop.f32.mrb[0].mxu0
        %v1373 = vadd.f32 0.0, %v1372
        %v1374 = vpop.f32.mrb[0].mxu0
        %1375 = vmatprep.mubr.bf16.mxu0 0
        %1376 = vmatmul.mubr.bf16.gmra.mrb[0].mxu0 %v705
        %v1377 = vpop.f32.mrb[0].mxu0
        %v1378 = vadd.f32 0.0, %v1377
        %v1379 = vpop.f32.mrb[0].mxu0
        %v1380 = vpop.f32.mrb[0].mxu0
        %v1381 = vadd.f32 0.0, %v1380
        %v1382 = vpop.f32.mrb[0].mxu0
        %1383 = vdwg.mxu0
        %1384 = vmatprep.subr.bf16.mxu0 0
        %1385 = vmatpush1.bf16.msra.mxu0 %v1185
        %1386 = vmatprep.subr.bf16.mxu0 0
        %1387 = vmatpush1.bf16.msra.mxu0 %v1186
        %1388 = vmatprep.subr.bf16.mxu0 0
        %1389 = vmatpush1.bf16.msra.mxu0 %v1187
        %1390 = vmatprep.subr.bf16.mxu0 0
        %1391 = vmatpush1.bf16.msra.mxu0 %v1188
        %1392 = vmatprep.subr.bf16.mxu0 0
        %1393 = vmatpush1.bf16.msra.mxu0 0
        %1394 = vmatprep.subr.bf16.mxu0 0
        %1395 = vmatpush1.bf16.msra.mxu0 0
        %1396 = vmatprep.subr.bf16.mxu0 0
        %1397 = vmatpush1.bf16.msra.mxu0 0
        %1398 = vmatprep.subr.bf16.mxu0 0
        %1399 = vmatpush1.bf16.msra.mxu0 0
        %1400 = vmatprep.subr.bf16.mxu0 0
        %1401 = vmatpush1.bf16.msra.mxu0 0
        %1402 = vmatprep.subr.bf16.mxu0 0
        %1403 = vmatpush1.bf16.msra.mxu0 0
        %1404 = vmatprep.subr.bf16.mxu0 0
        %1405 = vmatpush1.bf16.msra.mxu0 0
        %1406 = vmatprep.subr.bf16.mxu0 0
        %1407 = vmatpush1.bf16.msra.mxu0 0
        %1408 = vmatprep.subr.bf16.mxu0 0
        %1409 = vmatpush1.bf16.msra.mxu0 0
        %1410 = vmatprep.subr.bf16.mxu0 0
        %1411 = vmatpush1.bf16.msra.mxu0 0
        %1412 = vmatprep.subr.bf16.mxu0 0
        %1413 = vmatpush1.bf16.msra.mxu0 0
        %1414 = vmatprep.subr.bf16.mxu0 0
        %1415 = vmatpush1.bf16.msra.mxu0 0
        %1416 = vmatprep.mubr.bf16.mxu0 0
        %1417 = vmatmul.mubr.bf16.gmra.mrb[0].mxu0 %v817
        %v1418 = vpop.f32.mrb[0].mxu0
        %v1419 = vadd.f32 0.0, %v1418
        %v1420 = vpop.f32.mrb[0].mxu0
        %v1421 = vpop.f32.mrb[0].mxu0
        %v1422 = vadd.f32 0.0, %v1421
        %v1423 = vpop.f32.mrb[0].mxu0
        %1424 = vmatprep.mubr.bf16.mxu0 0
        %1425 = vmatmul.mubr.bf16.gmra.mrb[0].mxu0 %v820
        %v1426 = vpop.f32.mrb[0].mxu0
        %v1427 = vadd.f32 0.0, %v1426
        %v1428 = vpop.f32.mrb[0].mxu0
        %v1429 = vpop.f32.mrb[0].mxu0
        %v1430 = vadd.f32 0.0, %v1429
        %v1431 = vpop.f32.mrb[0].mxu0
        %1432 = vmatprep.mubr.bf16.mxu0 0
        %1433 = vmatmul.mubr.bf16.gmra.mrb[0].mxu0 %v823
        %v1434 = vpop.f32.mrb[0].mxu0
        %v1435 = vadd.f32 0.0, %v1434
        %v1436 = vpop.f32.mrb[0].mxu0
        %v1437 = vpop.f32.mrb[0].mxu0
        %v1438 = vadd.f32 0.0, %v1437
        %v1439 = vpop.f32.mrb[0].mxu0
        %1440 = vmatprep.mubr.bf16.mxu0 0
        %1441 = vmatmul.mubr.bf16.gmra.mrb[0].mxu0 %v826
        %v1442 = vpop.f32.mrb[0].mxu0
        %v1443 = vadd.f32 0.0, %v1442
        %v1444 = vpop.f32.mrb[0].mxu0
        %v1445 = vpop.f32.mrb[0].mxu0
        %v1446 = vadd.f32 0.0, %v1445
        %v1447 = vpop.f32.mrb[0].mxu0
        %1448 = vdwg.mxu0
        %v1449 = vpack.c.bf16 %v1227, %v1224
        %v1450 = vpack.c.bf16 %v1235, %v1232
        %v1451 = vpack.c.bf16 %v1243, %v1240
        %v1452 = vpack.c.bf16 %v1251, %v1248
        %v1453 = vpack.c.bf16 %v1292, %v1289
        %v1454 = vpack.c.bf16 %v1300, %v1297
        %v1455 = vpack.c.bf16 %v1308, %v1305
        %v1456 = vpack.c.bf16 %v1316, %v1313
        %v1457 = vpack.c.bf16 %v1357, %v1354
        %v1458 = vpack.c.bf16 %v1365, %v1362
        %v1459 = vpack.c.bf16 %v1373, %v1370
        %v1460 = vpack.c.bf16 %v1381, %v1378
        %v1461 = vpack.c.bf16 %v1422, %v1419
        %v1462 = vpack.c.bf16 %v1430, %v1427
        %v1463 = vpack.c.bf16 %v1438, %v1435
        %v1464 = vpack.c.bf16 %v1446, %v1443
        %s1465 = scalar_lea.vmem [#allocation7], 64
        %v1466 = vld [vmem:[%s1465] sm:$0xf]
        %v1467 = vld [vmem:[%s1465 + $0x4] sm:$0xf]
        %v1468 = vld [vmem:[%s1465 + $0x8] sm:$0xf]
        %v1469 = vld [vmem:[%s1465 + $0xc] sm:$0xf]
        %v1470 = vld [vmem:[%s1465 + $0x10] sm:$0xf]
        %v1471 = vld [vmem:[%s1465 + $0x14] sm:$0xf]
        %v1472 = vld [vmem:[%s1465 + $0x18] sm:$0xf]
        %v1473 = vld [vmem:[%s1465 + $0x1c] sm:$0xf]
        %v1474 = vld [vmem:[%s1465 + $0x20] sm:$0xf]
        %v1475 = vld [vmem:[%s1465 + $0x24] sm:$0xf]
        %v1476 = vld [vmem:[%s1465 + $0x28] sm:$0xf]
        %v1477 = vld [vmem:[%s1465 + $0x2c] sm:$0xf]
        %v1478 = vld [vmem:[%s1465 + $0x30] sm:$0xf]
        %v1479 = vld [vmem:[%s1465 + $0x34] sm:$0xf]
        %v1480 = vld [vmem:[%s1465 + $0x38] sm:$0xf]
        %v1481 = vld [vmem:[%s1465 + $0x3c] sm:$0xf]
        %s1482 = scalar_lea.vmem %s3, 1
        %v1483 = vld [vmem:[%s1482] sm:$0x1]
        %v1485 = vlaneseq
        %v1486 = vshrl.u32 %v1485, 7
        %v1487 = vsub.s32 0, %v1486
        %v1488 = vrot.slane %v1483, %v1487
        %v1506 = vunpack.c.l.b16 %v1466
        %v1507 = vunpack.c.l.b16 %v1467
        %v1508 = vunpack.c.l.b16 %v1468
        %v1509 = vunpack.c.l.b16 %v1469
        %v1510 = vunpack.c.l.b16 %v1470
        %v1511 = vunpack.c.l.b16 %v1471
        %v1512 = vunpack.c.l.b16 %v1472
        %v1513 = vunpack.c.l.b16 %v1473
        %v1514 = vunpack.c.l.b16 %v1474
        %v1515 = vunpack.c.l.b16 %v1475
        %v1516 = vunpack.c.l.b16 %v1476
        %v1517 = vunpack.c.l.b16 %v1477
        %v1518 = vunpack.c.l.b16 %v1478
        %v1519 = vunpack.c.l.b16 %v1479
        %v1520 = vunpack.c.l.b16 %v1480
        %v1521 = vunpack.c.l.b16 %v1481
        %v1522 = vpack.c.b16 %v1507, %v1506
        %v1523 = vpack.c.b16 %v1509, %v1508
        %v1524 = vpack.c.b16 %v1511, %v1510
        %v1525 = vpack.c.b16 %v1513, %v1512
        %v1526 = vpack.c.b16 %v1515, %v1514
        %v1527 = vpack.c.b16 %v1517, %v1516
        %v1528 = vpack.c.b16 %v1519, %v1518
        %v1529 = vpack.c.b16 %v1521, %v1520
        %1538 = vmatprep.subr.bf16.mxu0 0
        %1539 = vmatpush1.bf16.msra.mxu0 %v1522
        %1540 = vmatprep.subr.bf16.mxu0 0
        %1541 = vmatpush1.bf16.msra.mxu0 %v1523
        %1542 = vmatprep.subr.bf16.mxu0 0
        %1543 = vmatpush1.bf16.msra.mxu0 %v1524
        %1544 = vmatprep.subr.bf16.mxu0 0
        %1545 = vmatpush1.bf16.msra.mxu0 %v1525
        %1546 = vmatprep.subr.bf16.mxu0 0
        %1547 = vmatpush1.bf16.msra.mxu0 %v1526
        %1548 = vmatprep.subr.bf16.mxu0 0
        %1549 = vmatpush1.bf16.msra.mxu0 %v1527
        %1550 = vmatprep.subr.bf16.mxu0 0
        %1551 = vmatpush1.bf16.msra.mxu0 %v1528
        %1552 = vmatprep.subr.bf16.mxu0 0
        %1553 = vmatpush1.bf16.msra.mxu0 %v1529
        %1554 = vmatprep.subr.bf16.mxu0 0
        %1555 = vmatpush1.bf16.msra.mxu0 0
        %1556 = vmatprep.subr.bf16.mxu0 0
        %1557 = vmatpush1.bf16.msra.mxu0 0
        %1558 = vmatprep.subr.bf16.mxu0 0
        %1559 = vmatpush1.bf16.msra.mxu0 0
        %1560 = vmatprep.subr.bf16.mxu0 0
        %1561 = vmatpush1.bf16.msra.mxu0 0
        %1562 = vmatprep.subr.bf16.mxu0 0
        %1563 = vmatpush1.bf16.msra.mxu0 0
        %1564 = vmatprep.subr.bf16.mxu0 0
        %1565 = vmatpush1.bf16.msra.mxu0 0
        %1566 = vmatprep.subr.bf16.mxu0 0
        %1567 = vmatpush1.bf16.msra.mxu0 0
        %1568 = vmatprep.subr.bf16.mxu0 0
        %1569 = vmatpush1.bf16.msra.mxu0 0
        %1570 = vmatprep.mubr.bf16.mxu0 0
        %1571 = vmatmul.mubr.bf16.gmra.mrb[0].mxu0 %v1449
        %v1572 = vpop.f32.mrb[0].mxu0
        %v1573 = vadd.f32 %v1488, %v1572
        %v1574 = vpop.f32.mrb[0].mxu0
        %v1575 = vpop.f32.mrb[0].mxu0
        %v1576 = vadd.f32 %v1488, %v1575
        %v1577 = vpop.f32.mrb[0].mxu0
        %1578 = vmatprep.mubr.bf16.mxu0 0
        %1579 = vmatmul.mubr.bf16.gmra.mrb[0].mxu0 %v1450
        %v1580 = vpop.f32.mrb[0].mxu0
        %v1581 = vadd.f32 %v1488, %v1580
        %v1582 = vpop.f32.mrb[0].mxu0
        %v1583 = vpop.f32.mrb[0].mxu0
        %v1584 = vadd.f32 %v1488, %v1583
        %v1585 = vpop.f32.mrb[0].mxu0
        %1586 = vmatprep.mubr.bf16.mxu0 0
        %1587 = vmatmul.mubr.bf16.gmra.mrb[0].mxu0 %v1451
        %v1588 = vpop.f32.mrb[0].mxu0
        %v1589 = vadd.f32 %v1488, %v1588
        %v1590 = vpop.f32.mrb[0].mxu0
        %v1591 = vpop.f32.mrb[0].mxu0
        %v1592 = vadd.f32 %v1488, %v1591
        %v1593 = vpop.f32.mrb[0].mxu0
        %1594 = vmatprep.mubr.bf16.mxu0 0
        %1595 = vmatmul.mubr.bf16.gmra.mrb[0].mxu0 %v1452
        %v1596 = vpop.f32.mrb[0].mxu0
        %v1597 = vadd.f32 %v1488, %v1596
        %v1598 = vpop.f32.mrb[0].mxu0
        %v1599 = vpop.f32.mrb[0].mxu0
        %v1600 = vadd.f32 %v1488, %v1599
        %v1601 = vpop.f32.mrb[0].mxu0
        %1602 = vmatprep.mubr.bf16.mxu0 0
        %1603 = vmatmul.mubr.bf16.gmra.mrb[0].mxu0 %v1453
        %v1604 = vpop.f32.mrb[0].mxu0
        %v1605 = vadd.f32 %v1488, %v1604
        %v1606 = vpop.f32.mrb[0].mxu0
        %v1607 = vpop.f32.mrb[0].mxu0
        %v1608 = vadd.f32 %v1488, %v1607
        %v1609 = vpop.f32.mrb[0].mxu0
        %1610 = vmatprep.mubr.bf16.mxu0 0
        %1611 = vmatmul.mubr.bf16.gmra.mrb[0].mxu0 %v1454
        %v1612 = vpop.f32.mrb[0].mxu0
        %v1613 = vadd.f32 %v1488, %v1612
        %v1614 = vpop.f32.mrb[0].mxu0
        %v1615 = vpop.f32.mrb[0].mxu0
        %v1616 = vadd.f32 %v1488, %v1615
        %v1617 = vpop.f32.mrb[0].mxu0
        %1618 = vmatprep.mubr.bf16.mxu0 0
        %1619 = vmatmul.mubr.bf16.gmra.mrb[0].mxu0 %v1455
        %v1620 = vpop.f32.mrb[0].mxu0
        %v1621 = vadd.f32 %v1488, %v1620
        %v1622 = vpop.f32.mrb[0].mxu0
        %v1623 = vpop.f32.mrb[0].mxu0
        %v1624 = vadd.f32 %v1488, %v1623
        %v1625 = vpop.f32.mrb[0].mxu0
        %1626 = vmatprep.mubr.bf16.mxu0 0
        %1627 = vmatmul.mubr.bf16.gmra.mrb[0].mxu0 %v1456
        %v1628 = vpop.f32.mrb[0].mxu0
        %v1629 = vadd.f32 %v1488, %v1628
        %v1630 = vpop.f32.mrb[0].mxu0
        %v1631 = vpop.f32.mrb[0].mxu0
        %v1632 = vadd.f32 %v1488, %v1631
        %v1633 = vpop.f32.mrb[0].mxu0
        %1634 = vmatprep.mubr.bf16.mxu0 0
        %1635 = vmatmul.mubr.bf16.gmra.mrb[0].mxu0 %v1457
        %v1636 = vpop.f32.mrb[0].mxu0
        %v1637 = vadd.f32 %v1488, %v1636
        %v1638 = vpop.f32.mrb[0].mxu0
        %v1639 = vpop.f32.mrb[0].mxu0
        %v1640 = vadd.f32 %v1488, %v1639
        %v1641 = vpop.f32.mrb[0].mxu0
        %1642 = vmatprep.mubr.bf16.mxu0 0
        %1643 = vmatmul.mubr.bf16.gmra.mrb[0].mxu0 %v1458
        %v1644 = vpop.f32.mrb[0].mxu0
        %v1645 = vadd.f32 %v1488, %v1644
        %v1646 = vpop.f32.mrb[0].mxu0
        %v1647 = vpop.f32.mrb[0].mxu0
        %v1648 = vadd.f32 %v1488, %v1647
        %v1649 = vpop.f32.mrb[0].mxu0
        %1650 = vmatprep.mubr.bf16.mxu0 0
        %1651 = vmatmul.mubr.bf16.gmra.mrb[0].mxu0 %v1459
        %v1652 = vpop.f32.mrb[0].mxu0
        %v1653 = vadd.f32 %v1488, %v1652
        %v1654 = vpop.f32.mrb[0].mxu0
        %v1655 = vpop.f32.mrb[0].mxu0
        %v1656 = vadd.f32 %v1488, %v1655
        %v1657 = vpop.f32.mrb[0].mxu0
        %1658 = vmatprep.mubr.bf16.mxu0 0
        %1659 = vmatmul.mubr.bf16.gmra.mrb[0].mxu0 %v1460
        %v1660 = vpop.f32.mrb[0].mxu0
        %v1661 = vadd.f32 %v1488, %v1660
        %v1662 = vpop.f32.mrb[0].mxu0
        %v1663 = vpop.f32.mrb[0].mxu0
        %v1664 = vadd.f32 %v1488, %v1663
        %v1665 = vpop.f32.mrb[0].mxu0
        %1666 = vmatprep.mubr.bf16.mxu0 0
        %1667 = vmatmul.mubr.bf16.gmra.mrb[0].mxu0 %v1461
        %v1668 = vpop.f32.mrb[0].mxu0
        %v1669 = vadd.f32 %v1488, %v1668
        %v1670 = vpop.f32.mrb[0].mxu0
        %v1671 = vpop.f32.mrb[0].mxu0
        %v1672 = vadd.f32 %v1488, %v1671
        %v1673 = vpop.f32.mrb[0].mxu0
        %1674 = vmatprep.mubr.bf16.mxu0 0
        %1675 = vmatmul.mubr.bf16.gmra.mrb[0].mxu0 %v1462
        %v1676 = vpop.f32.mrb[0].mxu0
        %v1677 = vadd.f32 %v1488, %v1676
        %v1678 = vpop.f32.mrb[0].mxu0
        %v1679 = vpop.f32.mrb[0].mxu0
        %v1680 = vadd.f32 %v1488, %v1679
        %v1681 = vpop.f32.mrb[0].mxu0
        %1682 = vmatprep.mubr.bf16.mxu0 0
        %1683 = vmatmul.mubr.bf16.gmra.mrb[0].mxu0 %v1463
        %v1684 = vpop.f32.mrb[0].mxu0
        %v1685 = vadd.f32 %v1488, %v1684
        %v1686 = vpop.f32.mrb[0].mxu0
        %v1687 = vpop.f32.mrb[0].mxu0
        %v1688 = vadd.f32 %v1488, %v1687
        %v1689 = vpop.f32.mrb[0].mxu0
        %1690 = vmatprep.mubr.bf16.mxu0 0
        %1691 = vmatmul.mubr.bf16.gmra.mrb[0].mxu0 %v1464
        %v1692 = vpop.f32.mrb[0].mxu0
        %v1693 = vadd.f32 %v1488, %v1692
        %v1694 = vpop.f32.mrb[0].mxu0
        %v1695 = vpop.f32.mrb[0].mxu0
        %v1696 = vadd.f32 %v1488, %v1695
        %v1697 = vpop.f32.mrb[0].mxu0
        %1698 = vdwg.mxu0
        %v1699 = vmax.f32 %v1573, 0.0
        %v1700 = vmax.f32 %v1576, 0.0
        %v1701 = vmax.f32 %v1581, 0.0
        %v1702 = vmax.f32 %v1584, 0.0
        %v1703 = vmax.f32 %v1589, 0.0
        %v1704 = vmax.f32 %v1592, 0.0
        %v1705 = vmax.f32 %v1597, 0.0
        %v1706 = vmax.f32 %v1600, 0.0
        %v1707 = vmax.f32 %v1605, 0.0
        %v1708 = vmax.f32 %v1608, 0.0
        %v1709 = vmax.f32 %v1613, 0.0
        %v1710 = vmax.f32 %v1616, 0.0
        %v1711 = vmax.f32 %v1621, 0.0
        %v1712 = vmax.f32 %v1624, 0.0
        %v1713 = vmax.f32 %v1629, 0.0
        %v1714 = vmax.f32 %v1632, 0.0
        %v1715 = vmax.f32 %v1637, 0.0
        %v1716 = vmax.f32 %v1640, 0.0
        %v1717 = vmax.f32 %v1645, 0.0
        %v1718 = vmax.f32 %v1648, 0.0
        %v1719 = vmax.f32 %v1653, 0.0
        %v1720 = vmax.f32 %v1656, 0.0
        %v1721 = vmax.f32 %v1661, 0.0
        %v1722 = vmax.f32 %v1664, 0.0
        %v1723 = vmax.f32 %v1669, 0.0
        %v1724 = vmax.f32 %v1672, 0.0
        %v1725 = vmax.f32 %v1677, 0.0
        %v1726 = vmax.f32 %v1680, 0.0
        %v1727 = vmax.f32 %v1685, 0.0
        %v1728 = vmax.f32 %v1688, 0.0
        %v1729 = vmax.f32 %v1693, 0.0
        %v1730 = vmax.f32 %v1696, 0.0
        %v1731 = vadd.f32 %v1699, %v1700
        %v1732 = vadd.f32 %v1731, %v1701
        %v1733 = vadd.f32 %v1732, %v1702
        %v1734 = vadd.f32 %v1733, %v1703
        %v1735 = vadd.f32 %v1734, %v1704
        %v1736 = vadd.f32 %v1735, %v1705
        %v1737 = vadd.f32 %v1736, %v1706
        %v1738 = vrot.slane %v1737, 4
        %v1739 = vadd.f32 %v1737, %v1738
        %v1740 = vrot.slane %v1739, 2
        %v1741 = vadd.f32 %v1739, %v1740
        %v1742 = vrot.slane %v1741, 1
        %v1743 = vadd.f32 %v1741, %v1742
        %v1744 = vadd.f32 %v1707, %v1708
        %v1745 = vadd.f32 %v1744, %v1709
        %v1746 = vadd.f32 %v1745, %v1710
        %v1747 = vadd.f32 %v1746, %v1711
        %v1748 = vadd.f32 %v1747, %v1712
        %v1749 = vadd.f32 %v1748, %v1713
        %v1750 = vadd.f32 %v1749, %v1714
        %v1751 = vrot.slane %v1750, 4
        %v1752 = vadd.f32 %v1750, %v1751
        %v1753 = vrot.slane %v1752, 2
        %v1754 = vadd.f32 %v1752, %v1753
        %v1755 = vrot.slane %v1754, 1
        %v1756 = vadd.f32 %v1754, %v1755
        %v1757 = vadd.f32 %v1715, %v1716
        %v1758 = vadd.f32 %v1757, %v1717
        %v1759 = vadd.f32 %v1758, %v1718
        %v1760 = vadd.f32 %v1759, %v1719
        %v1761 = vadd.f32 %v1760, %v1720
        %v1762 = vadd.f32 %v1761, %v1721
        %v1763 = vadd.f32 %v1762, %v1722
        %v1764 = vrot.slane %v1763, 4
        %v1765 = vadd.f32 %v1763, %v1764
        %v1766 = vrot.slane %v1765, 2
        %v1767 = vadd.f32 %v1765, %v1766
        %v1768 = vrot.slane %v1767, 1
        %v1769 = vadd.f32 %v1767, %v1768
        %v1770 = vadd.f32 %v1723, %v1724
        %v1771 = vadd.f32 %v1770, %v1725
        %v1772 = vadd.f32 %v1771, %v1726
        %v1773 = vadd.f32 %v1772, %v1727
        %v1774 = vadd.f32 %v1773, %v1728
        %v1775 = vadd.f32 %v1774, %v1729
        %v1776 = vadd.f32 %v1775, %v1730
        %v1777 = vrot.slane %v1776, 4
        %v1778 = vadd.f32 %v1776, %v1777
        %v1779 = vrot.slane %v1778, 2
        %v1780 = vadd.f32 %v1778, %v1779
        %v1781 = vrot.slane %v1780, 1
        %v1782 = vadd.f32 %v1780, %v1781
        %v1783 = vmul.f32 %v1743, 0.015625
        %v1784 = vmul.f32 %v1756, 0.015625
        %v1785 = vmul.f32 %v1769, 0.015625
        %v1786 = vmul.f32 %v1782, 0.015625
        %v1787 = vpack.c.bf16 %v1783, %v1783
        %v1788 = vpack.c.bf16 %v1784, %v1784
        %v1789 = vpack.c.bf16 %v1785, %v1785
        %v1790 = vpack.c.bf16 %v1786, %v1786
        %v1791 = vld [vmem:[#allocation8] sm:$0xf]
        %v1792 = vld [vmem:[#allocation8 + $0x4] sm:$0xf]
        %v1793 = vld [vmem:[#allocation8 + $0x8] sm:$0xf]
        %v1794 = vld [vmem:[#allocation8 + $0xc] sm:$0xf]
        %v1795 = vld [vmem:[#allocation8 + $0x10] sm:$0xf]
        %v1796 = vld [vmem:[#allocation8 + $0x14] sm:$0xf]
        %v1797 = vld [vmem:[#allocation8 + $0x18] sm:$0xf]
        %v1798 = vld [vmem:[#allocation8 + $0x1c] sm:$0xf]
        %v1799 = vld [vmem:[#allocation8 + $0x20] sm:$0xf]
        %v1800 = vld [vmem:[#allocation8 + $0x24] sm:$0xf]
        %v1801 = vld [vmem:[#allocation8 + $0x28] sm:$0xf]
        %v1802 = vld [vmem:[#allocation8 + $0x2c] sm:$0xf]
        %v1803 = vld [vmem:[#allocation8 + $0x30] sm:$0xf]
        %v1804 = vld [vmem:[#allocation8 + $0x34] sm:$0xf]
        %v1805 = vld [vmem:[#allocation8 + $0x38] sm:$0xf]
        %v1806 = vld [vmem:[#allocation8 + $0x3c] sm:$0xf]
        %v1807 = vld [vmem:[%s5] sm:$0x1]
        %v1809 = vlaneseq
        %v1810 = vshrl.u32 %v1809, 7
        %v1811 = vsub.s32 0, %v1810
        %v1812 = vrot.slane %v1807, %v1811
        %v1818 = vunpack.c.l.b16 %v1787
        %v1819 = vunpack.c.l.b16 %v1788
        %v1820 = vunpack.c.l.b16 %v1789
        %v1821 = vunpack.c.l.b16 %v1790
        %vm1822 = vcmask 1041409
        %v1823 = vsel %vm1822, %v1819, %v1818
        %vm1824 = vcmask 1042434
        %v1825 = vsel %vm1824, %v1820, %v1823
        %vm1826 = vcmask 1043459
        %v1827 = vsel %vm1826, %v1821, %v1825
        %v1828 = vpack.c.b16 %v1827, %v1827
        %v1846 = vunpack.c.l.b16 %v1791
        %v1847 = vunpack.c.l.b16 %v1792
        %v1848 = vunpack.c.l.b16 %v1793
        %v1849 = vunpack.c.l.b16 %v1794
        %v1850 = vunpack.c.l.b16 %v1795
        %v1851 = vunpack.c.l.b16 %v1796
        %v1852 = vunpack.c.l.b16 %v1797
        %v1853 = vunpack.c.l.b16 %v1798
        %v1854 = vunpack.c.l.b16 %v1799
        %v1855 = vunpack.c.l.b16 %v1800
        %v1856 = vunpack.c.l.b16 %v1801
        %v1857 = vunpack.c.l.b16 %v1802
        %v1858 = vunpack.c.l.b16 %v1803
        %v1859 = vunpack.c.l.b16 %v1804
        %v1860 = vunpack.c.l.b16 %v1805
        %v1861 = vunpack.c.l.b16 %v1806
        %v1862 = vpack.c.b16 %v1847, %v1846
        %v1863 = vpack.c.b16 %v1849, %v1848
        %v1864 = vpack.c.b16 %v1851, %v1850
        %v1865 = vpack.c.b16 %v1853, %v1852
        %v1866 = vpack.c.b16 %v1855, %v1854
        %v1867 = vpack.c.b16 %v1857, %v1856
        %v1868 = vpack.c.b16 %v1859, %v1858
        %v1869 = vpack.c.b16 %v1861, %v1860
        %1878 = vmatprep.subr.bf16.mxu0 0
        %1879 = vmatpush1.bf16.msra.mxu0 %v1862
        %1880 = vmatprep.subr.bf16.mxu0 0
        %1881 = vmatpush1.bf16.msra.mxu0 %v1863
        %1882 = vmatprep.subr.bf16.mxu0 0
        %1883 = vmatpush1.bf16.msra.mxu0 %v1864
        %1884 = vmatprep.subr.bf16.mxu0 0
        %1885 = vmatpush1.bf16.msra.mxu0 %v1865
        %1886 = vmatprep.subr.bf16.mxu0 0
        %1887 = vmatpush1.bf16.msra.mxu0 %v1866
        %1888 = vmatprep.subr.bf16.mxu0 0
        %1889 = vmatpush1.bf16.msra.mxu0 %v1867
        %1890 = vmatprep.subr.bf16.mxu0 0
        %1891 = vmatpush1.bf16.msra.mxu0 %v1868
        %1892 = vmatprep.subr.bf16.mxu0 0
        %1893 = vmatpush1.bf16.msra.mxu0 %v1869
        %1894 = vmatprep.subr.bf16.mxu0 0
        %1895 = vmatpush1.bf16.msra.mxu0 0
        %1896 = vmatprep.subr.bf16.mxu0 0
        %1897 = vmatpush1.bf16.msra.mxu0 0
        %1898 = vmatprep.subr.bf16.mxu0 0
        %1899 = vmatpush1.bf16.msra.mxu0 0
        %1900 = vmatprep.subr.bf16.mxu0 0
        %1901 = vmatpush1.bf16.msra.mxu0 0
        %1902 = vmatprep.subr.bf16.mxu0 0
        %1903 = vmatpush1.bf16.msra.mxu0 0
        %1904 = vmatprep.subr.bf16.mxu0 0
        %1905 = vmatpush1.bf16.msra.mxu0 0
        %1906 = vmatprep.subr.bf16.mxu0 0
        %1907 = vmatpush1.bf16.msra.mxu0 0
        %1908 = vmatprep.subr.bf16.mxu0 0
        %1909 = vmatpush1.bf16.msra.mxu0 0
        %1910 = vmatprep.mubr.bf16.mxu0 0
        %1911 = vmatmul.mubr.bf16.gmra.mrb[0].mxu0 %v1828
        %v1912 = vpop.f32.mrb[0].mxu0
        %v1913 = vadd.f32 %v1812, %v1912
        %v1914 = vpop.f32.mrb[0].mxu0
        %v1915 = vpop.f32.mrb[0].mxu0
        %v1916 = vpop.f32.mrb[0].mxu0
        %1917 = vdwg.mxu0
        %1918 = vst [vmem:[%s340] sm:$0xf] %v1913
        %s1919 = sand.u32 %s171, 1
        %s1920 = scalar_lea.sflag [#allocation4], %s1919
        %s1921 = sand.u32 %s171, 1
        %s1922 = smul.addr %s1921, 4
        %s1923 = scalar_lea.vmem [#allocation10], %s1922
        // Predicated region
        $region61: #{tpu_custom_call.1} parent=43 // pred_check
          %p1924 = pneg %p181
        $region62: #{tpu_custom_call.1} parent=43 // pred_check_branch
          %1926 = sbr.rel (%p1924) target = $region64
        $region63: #{tpu_custom_call.1} parent=43 // pred_region
          %s1928 = ssub.s32 64, 64
          %1929 = vsyncadd %s1920, %s1928
          %s1930 = smul.addr %s27, 64
          %s1931 = scalar_lea.hbm %s6, %s1930
          %s1933 = sshll.u32 %s1923, 4
          %s1934 = int_to_ptr.vmem [resolvable:$true] %s1933
          %1936 = dma.vmem_to_hbm [thread:$0]  %s1934, 64, %s1931, %s1920
        $region64: #{tpu_custom_call.1} parent=43 // pred_fallthru
          _
      $region44: #{tpu_custom_call.1} parent=5 // pred_fallthru
        _
      %p1937 = scmp.le.s32.totalorder 2, %s22
      // Predicated region
      $region65: #{tpu_custom_call.1} parent=5 // pred_check
        %p1938 = pneg %p1937
      $region66: #{tpu_custom_call.1} parent=5 // pred_check_branch
        %1940 = sbr.rel (%p1938) target = $region68
      $region67: #{tpu_custom_call.1} parent=5 // pred_region
        %s1941 = ssub.s32 %s22, 2
        // Predicated region
        $region69: #{tpu_custom_call.1} parent=67 // pred_check
          %p1942 = pneg %p187
        $region70: #{tpu_custom_call.1} parent=67 // pred_check_branch
          %1944 = sbr.rel (%p1942) target = $region72
        $region71: #{tpu_custom_call.1} parent=67 // pred_region
          %s1945 = sand.u32 %s172, 1
          %s1946 = scalar_lea.sflag [#allocation4], %s1945
          %s1947 = sand.u32 %s172, 1
          %s1948 = smul.addr %s1947, 4
          %s1949 = scalar_lea.vmem [#allocation10], %s1948
          %1950 = dma.done %s1946, 64
        $region72: #{tpu_custom_call.1} parent=67 // pred_fallthru
          _
      $region68: #{tpu_custom_call.1} parent=5 // pred_fallthru
        _
    $region6: #{tpu_custom_call.1} parent=1 // loop_footer
      %s26 = sadd.s32 1, %s22
    $region7: #{tpu_custom_call.1} parent=1 // loop_footer_branch
      %21 = sbr.rel target = $region3
    $region8: #{tpu_custom_call.1} parent=1 // loop_exit
      _
    %1951 = vsyncpa [#allocation3], 1
    %s1952 = scalar_lea.sflag [#allocation3], 1
    %1953 = vsyncpa %s1952, 1
    %1954 = vsyncpa [#allocation6], 1
    %s1955 = scalar_lea.sflag [#allocation6], 1
    %1956 = vsyncpa %s1955, 1
    %1957 = vsyncpa [#allocation9], 1
    %1958 = vsyncpa [#allocation4], 1
    %s1959 = scalar_lea.sflag [#allocation4], 1
    %1960 = vsyncpa %s1959, 1

</llo_original>
